<compile_context>
chip_gen: v6e
topology: v6e:2x2x1
jax: 0.10.0
libtpu: 0.0.40
codegen_flags: <defaults>
</compile_context>

<pallas_src>
import functools

import jax
import jax.numpy as jnp
from jax import lax
from jax.experimental import pallas as pl
from jax.experimental.pallas import tpu as pltpu

LANE = 128


def _round_up(x, m):
    return (x + m - 1) // m * m


def _repvgg_kernel(xpad_ref, w_ref, b_ref, o_ref, acc_ref, *, TH, W, Cin_p, Cout_p):
    # xpad_ref: (H+2, W+2, Cin_p) bf16 -- full zero-padded image for this batch element
    #           (block index is constant across row tiles -> fetched once per image).
    # w_ref:    (3, 3*Cin_p, Cout_p) bf16 -- fully re-parameterized weights, dx packed in K.
    # b_ref:    (1, Cout_p) f32        -- combined bias of all three branches.
    # o_ref:    (TH, W, Cout_p) f32    -- one row tile of the output.
    # acc_ref:  (TH*W, Cout_p) f32     -- VMEM scratch accumulator.
    t = pl.program_id(1)
    row0 = pl.multiple_of(t * TH, TH)

    for dy in range(3):
        rows = xpad_ref[pl.ds(row0 + dy, TH), :, :]                 # (TH, W+2, Cin_p)
        # Pack the 3 dx taps along the contraction dim -> K = 3*Cin_p.
        packed = jnp.concatenate(
            [rows[:, dx:dx + W, :] for dx in range(3)], axis=-1)    # (TH, W, 3*Cin_p)
        a = packed.reshape(TH * W, 3 * Cin_p)                       # bf16 activations
        contrib = jnp.dot(a, w_ref[dy], preferred_element_type=jnp.float32)
        if dy == 0:
            acc_ref[...] = contrib
        else:
            acc_ref[...] += contrib

    out = jnp.maximum(acc_ref[...] + b_ref[...], 0.0)               # bias + ReLU
    o_ref[...] = out.reshape(TH, W, Cout_p).astype(o_ref.dtype)


def repvgg_block_pallas(x_nhwc, w_folded_hwio, bias):
    """Deploy-mode RepVGG block: ReLU(conv3x3(x, w_folded) + bias).

    x_nhwc: (N, H, W, Cin) f32; w_folded_hwio: (3, 3, Cin, Cout) f32 with the 1x1 and
    identity branches already folded into the center tap; bias: (Cout,) f32.
    Returns (N, H, W, Cout) f32.
    """
    N, H, W, Cin = x_nhwc.shape
    Cout = w_folded_hwio.shape[-1]
    Cin_p, Cout_p = _round_up(Cin, LANE), _round_up(Cout, LANE)

    TH = 8 if H % 8 == 0 else H          # row tile (bounds acc / output VMEM)
    nT = H // TH

    # Spatial zero-pad (padding=1) fused with the lane-dense channel pad; bf16 for the MXU.
    xpad = jnp.pad(
        x_nhwc, ((0, 0), (1, 1), (1, 1), (0, Cin_p - Cin))).astype(jnp.bfloat16)
    w_p = jnp.pad(
        w_folded_hwio, ((0, 0), (0, 0), (0, Cin_p - Cin), (0, Cout_p - Cout)))
    w_packed = w_p.reshape(3, 3 * Cin_p, Cout_p).astype(jnp.bfloat16)
    b_p = jnp.pad(bias, (0, Cout_p - Cout)).reshape(1, Cout_p).astype(jnp.float32)

    kernel = functools.partial(_repvgg_kernel, TH=TH, W=W, Cin_p=Cin_p, Cout_p=Cout_p)
    out = pl.pallas_call(
        kernel,
        out_shape=jax.ShapeDtypeStruct((N, H, W, Cout_p), jnp.float32),
        grid_spec=pltpu.PrefetchScalarGridSpec(
            num_scalar_prefetch=0,
            grid=(N, nT),
            in_specs=[
                pl.BlockSpec((None, H + 2, W + 2, Cin_p), lambda n, t: (n, 0, 0, 0)),
                pl.BlockSpec((3, 3 * Cin_p, Cout_p), lambda n, t: (0, 0, 0)),
                pl.BlockSpec((1, Cout_p), lambda n, t: (0, 0)),
            ],
            out_specs=pl.BlockSpec((None, TH, W, Cout_p), lambda n, t: (n, t, 0, 0)),
            scratch_shapes=[pltpu.VMEM((TH * W, Cout_p), jnp.float32)],
        ),
        compiler_params=pltpu.CompilerParams(
            dimension_semantics=("parallel", "parallel"),
            vmem_limit_bytes=32 * 1024 * 1024,
        ),
        cost_estimate=pl.CostEstimate(
            flops=int(2 * N * H * W * 9 * Cin_p * Cout_p),
            transcendentals=0,
            bytes_accessed=int(xpad.size * 2 + w_packed.size * 2 + b_p.size * 4
                               + N * H * W * Cout_p * 4),
        ),
    )(xpad, w_packed, b_p)
    return out[..., :Cout]
    # TODO(synk): for very large H*W the whole padded image per batch element still sits
    # in VMEM; switch the input to Element-indexed halo row tiles (or manual DMA) there.


def fold_bn(gamma, beta, mean, var, eps=1e-5):
    s = gamma / jnp.sqrt(var + eps)
    return s, beta - mean * s


if __name__ == "__main__":
    key = jax.random.PRNGKey(0)
    N, C, Hs, Ws = 2, 4, 16, 16          # Cin == Cout, stride=1 -> identity branch active
    Cin = Cout = C
    eps = 1e-5

    ks = jax.random.split(key, 13)
    # Conv weights (PyTorch layout (Cout, Cin, kH, kW)), no conv bias.
    w3_torch = jax.random.normal(ks[0], (Cout, Cin, 3, 3), jnp.float32) * 0.1
    w1_torch = jax.random.normal(ks[1], (Cout, Cin, 1, 1), jnp.float32) * 0.1
    # Eval-mode BatchNorm params for the dense / 1x1 / identity branches.
    g3 = jax.random.uniform(ks[2], (Cout,), jnp.float32, 0.5, 1.5)
    b3 = jax.random.normal(ks[3], (Cout,), jnp.float32) * 0.1
    m3 = jax.random.normal(ks[4], (Cout,), jnp.float32) * 0.1
    v3 = jax.random.uniform(ks[5], (Cout,), jnp.float32, 0.5, 1.5)
    g1 = jax.random.uniform(ks[6], (Cout,), jnp.float32, 0.5, 1.5)
    b1 = jax.random.normal(ks[7], (Cout,), jnp.float32) * 0.1
    m1 = jax.random.normal(ks[8], (Cout,), jnp.float32) * 0.1
    v1 = jax.random.uniform(ks[9], (Cout,), jnp.float32, 0.5, 1.5)
    gi = jax.random.uniform(ks[10], (Cin,), jnp.float32, 0.5, 1.5)
    bi = jax.random.normal(ks[11], (Cin,), jnp.float32) * 0.1
    mi = jax.random.normal(ks[12], (Cin,), jnp.float32) * 0.1
    vi = jax.random.uniform(key, (Cin,), jnp.float32, 0.5, 1.5)

    # --- full RepVGG re-parameterization (deploy-mode fold) ---
    s3, bb3 = fold_bn(g3, b3, m3, v3, eps)
    s1, bb1 = fold_bn(g1, b1, m1, v1, eps)
    sid, bid = fold_bn(gi, bi, mi, vi, eps)

    w3_hwio = jnp.transpose(w3_torch, (2, 3, 1, 0)) * s3[None, None, None, :]
    w1_io = jnp.transpose(w1_torch[:, :, 0, 0], (1, 0)) * s1[None, :]
    w_folded = w3_hwio.at[1, 1].add(w1_io)           # 1x1 branch -> center tap
    bias = bb3 + bb1
    if Cin == Cout:                                  # identity-BN branch (stride=1 only)
        w_folded = w_folded.at[1, 1].add(jnp.diag(sid))
        bias = bias + bid

    # Input: PyTorch NCHW convention -> kernel NHWC.
    x_nchw = jax.random.normal(jax.random.PRNGKey(42), (N, C, Hs, Ws), jnp.float32)
    x_nhwc = jnp.transpose(x_nchw, (0, 2, 3, 1))

    out_nhwc = repvgg_block_pallas(x_nhwc, w_folded, bias)
    out_nchw = jnp.transpose(out_nhwc, (0, 3, 1, 2))
    jax.block_until_ready(out_nchw)

    # Pure-JAX reference on the same bf16-rounded operands (kernel uses bf16 MXU inputs
    # with f32 accumulation).
    x_bf = x_nhwc.astype(jnp.bfloat16).astype(jnp.float32)
    w_bf = w_folded.astype(jnp.bfloat16).astype(jnp.float32)
    ref = lax.conv_general_dilated(
        x_bf, w_bf, window_strides=(1, 1), padding=((1, 1), (1, 1)),
        dimension_numbers=("NHWC", "HWIO", "NHWC"))
    ref = jnp.maximum(ref + bias[None, None, None, :], 0.0)
    assert out_nhwc.shape == ref.shape
    assert jnp.allclose(out_nhwc, ref, atol=1e-2, rtol=1e-2), "mismatch vs reference"

    # TODO(synk): SEBlock path (use_se=True) and stride=2 / groups>1 variants not implemented.
    print("KERNEL_OK")
</pallas_src>

<mosaic_0001>
module attributes {stable_mosaic.version = 11 : i64} {
  func.func @_repvgg_kernel(%arg0: i32, %arg1: i32, %arg2: memref<1x18x18x128xbf16, #tpu.memory_space<vmem>>, %arg3: memref<3x384x128xbf16, #tpu.memory_space<vmem>>, %arg4: memref<1x128xf32, #tpu.memory_space<vmem>>, %arg5: memref<1x8x16x128xf32, #tpu.memory_space<vmem>>, %arg6: memref<128x128xf32, #tpu.memory_space<vmem>>) attributes {dimension_semantics = [#tpu.dimension_semantics<parallel>, #tpu.dimension_semantics<parallel>], iteration_bounds = array<i64: 2, 2>, scalar_prefetch = 0 : i64, scratch_operands = 1 : i64, tpu.core_type = #tpu.core_type<tc>, window_params = [{transform_indices = @transform_0, window_bounds = array<i64: 1, 18, 18, 128>}, {pipeline_mode = #tpu.pipeline_mode<synchronous>, transform_indices = @transform_1, window_bounds = array<i64: 3, 384, 128>}, {pipeline_mode = #tpu.pipeline_mode<synchronous>, transform_indices = @transform_2, window_bounds = array<i64: 1, 128>}, {transform_indices = @transform_3, window_bounds = array<i64: 1, 8, 16, 128>}]} {
    %c8_i32 = arith.constant 8 : i32
    %0 = arith.muli %arg1, %c8_i32 : i32
    %1 = tpu.assume_multiple %0, 8 : i32
    %c0_i32 = arith.constant 0 : i32
    %2 = arith.addi %1, %c0_i32 : i32
    %c0 = arith.constant 0 : index
    %3 = arith.index_cast %2 : i32 to index
    %c0_0 = arith.constant 0 : index
    %c0_1 = arith.constant 0 : index
    %4 = vector.load %arg2[%c0, %3, %c0_0, %c0_1] : memref<1x18x18x128xbf16, #tpu.memory_space<vmem>>, vector<1x8x18x128xbf16>
    %5 = vector.shape_cast %4 : vector<1x8x18x128xbf16> to vector<8x18x128xbf16>
    %6 = vector.extract_strided_slice %5 {offsets = [0, 0, 0], sizes = [8, 16, 128], strides = [1, 1, 1]} : vector<8x18x128xbf16> to vector<8x16x128xbf16>
    %7 = vector.extract_strided_slice %5 {offsets = [0, 1, 0], sizes = [8, 16, 128], strides = [1, 1, 1]} : vector<8x18x128xbf16> to vector<8x16x128xbf16>
    %8 = vector.extract_strided_slice %5 {offsets = [0, 2, 0], sizes = [8, 16, 128], strides = [1, 1, 1]} : vector<8x18x128xbf16> to vector<8x16x128xbf16>
    %9 = tpu.concatenate %6, %7, %8 in 2 : vector<8x16x128xbf16>, vector<8x16x128xbf16>, vector<8x16x128xbf16> -> vector<8x16x384xbf16>
    %10 = vector.shape_cast %9 : vector<8x16x384xbf16> to vector<128x384xbf16>
    %c0_2 = arith.constant 0 : index
    %c0_3 = arith.constant 0 : index
    %c0_4 = arith.constant 0 : index
    %11 = vector.load %arg3[%c0_2, %c0_3, %c0_4] : memref<3x384x128xbf16, #tpu.memory_space<vmem>>, vector<1x384x128xbf16>
    %12 = vector.shape_cast %11 : vector<1x384x128xbf16> to vector<384x128xbf16>
    %cst = arith.constant dense<0.000000e+00> : vector<128x128xf32>
    %13 = tpu.matmul %10, %12, %cst {dimension_numbers = #tpu.dot_dimension_numbers<[1], [0], [0], [1], [0, 0, 1, 1], [], []>} : vector<128x384xbf16>, vector<384x128xbf16>, vector<128x128xf32> -> vector<128x128xf32>
    %c0_5 = arith.constant 0 : index
    %c0_6 = arith.constant 0 : index
    %14 = vector.load %arg6[%c0_5, %c0_6] : memref<128x128xf32, #tpu.memory_space<vmem>>, vector<128x128xf32>
    tpu.vector_store %arg6[%c0_5, %c0_6], %13 {strides = array<i32>} : memref<128x128xf32, #tpu.memory_space<vmem>>, vector<128x128xf32>,
    %c1_i32 = arith.constant 1 : i32
    %15 = arith.addi %1, %c1_i32 : i32
    %c0_7 = arith.constant 0 : index
    %16 = arith.index_cast %15 : i32 to index
    %c0_8 = arith.constant 0 : index
    %c0_9 = arith.constant 0 : index
    %17 = vector.load %arg2[%c0_7, %16, %c0_8, %c0_9] : memref<1x18x18x128xbf16, #tpu.memory_space<vmem>>, vector<1x8x18x128xbf16>
    %18 = vector.shape_cast %17 : vector<1x8x18x128xbf16> to vector<8x18x128xbf16>
    %19 = vector.extract_strided_slice %18 {offsets = [0, 0, 0], sizes = [8, 16, 128], strides = [1, 1, 1]} : vector<8x18x128xbf16> to vector<8x16x128xbf16>
    %20 = vector.extract_strided_slice %18 {offsets = [0, 1, 0], sizes = [8, 16, 128], strides = [1, 1, 1]} : vector<8x18x128xbf16> to vector<8x16x128xbf16>
    %21 = vector.extract_strided_slice %18 {offsets = [0, 2, 0], sizes = [8, 16, 128], strides = [1, 1, 1]} : vector<8x18x128xbf16> to vector<8x16x128xbf16>
    %22 = tpu.concatenate %19, %20, %21 in 2 : vector<8x16x128xbf16>, vector<8x16x128xbf16>, vector<8x16x128xbf16> -> vector<8x16x384xbf16>
    %23 = vector.shape_cast %22 : vector<8x16x384xbf16> to vector<128x384xbf16>
    %c1 = arith.constant 1 : index
    %c0_10 = arith.constant 0 : index
    %c0_11 = arith.constant 0 : index
    %24 = vector.load %arg3[%c1, %c0_10, %c0_11] : memref<3x384x128xbf16, #tpu.memory_space<vmem>>, vector<1x384x128xbf16>
    %25 = vector.shape_cast %24 : vector<1x384x128xbf16> to vector<384x128xbf16>
    %cst_12 = arith.constant dense<0.000000e+00> : vector<128x128xf32>
    %26 = tpu.matmul %23, %25, %cst_12 {dimension_numbers = #tpu.dot_dimension_numbers<[1], [0], [0], [1], [0, 0, 1, 1], [], []>} : vector<128x384xbf16>, vector<384x128xbf16>, vector<128x128xf32> -> vector<128x128xf32>
    %c0_13 = arith.constant 0 : index
    %c0_14 = arith.constant 0 : index
    %27 = vector.load %arg6[%c0_13, %c0_14] : memref<128x128xf32, #tpu.memory_space<vmem>>, vector<128x128xf32>
    %28 = arith.addf %27, %26 : vector<128x128xf32>
    %c0_15 = arith.constant 0 : index
    %c0_16 = arith.constant 0 : index
    %29 = vector.load %arg6[%c0_15, %c0_16] : memref<128x128xf32, #tpu.memory_space<vmem>>, vector<128x128xf32>
    tpu.vector_store %arg6[%c0_15, %c0_16], %28 {strides = array<i32>} : memref<128x128xf32, #tpu.memory_space<vmem>>, vector<128x128xf32>,
    %c2_i32 = arith.constant 2 : i32
    %30 = arith.addi %1, %c2_i32 : i32
    %c0_17 = arith.constant 0 : index
    %31 = arith.index_cast %30 : i32 to index
    %c0_18 = arith.constant 0 : index
    %c0_19 = arith.constant 0 : index
    %32 = vector.load %arg2[%c0_17, %31, %c0_18, %c0_19] : memref<1x18x18x128xbf16, #tpu.memory_space<vmem>>, vector<1x8x18x128xbf16>
    %33 = vector.shape_cast %32 : vector<1x8x18x128xbf16> to vector<8x18x128xbf16>
    %34 = vector.extract_strided_slice %33 {offsets = [0, 0, 0], sizes = [8, 16, 128], strides = [1, 1, 1]} : vector<8x18x128xbf16> to vector<8x16x128xbf16>
    %35 = vector.extract_strided_slice %33 {offsets = [0, 1, 0], sizes = [8, 16, 128], strides = [1, 1, 1]} : vector<8x18x128xbf16> to vector<8x16x128xbf16>
    %36 = vector.extract_strided_slice %33 {offsets = [0, 2, 0], sizes = [8, 16, 128], strides = [1, 1, 1]} : vector<8x18x128xbf16> to vector<8x16x128xbf16>
    %37 = tpu.concatenate %34, %35, %36 in 2 : vector<8x16x128xbf16>, vector<8x16x128xbf16>, vector<8x16x128xbf16> -> vector<8x16x384xbf16>
    %38 = vector.shape_cast %37 : vector<8x16x384xbf16> to vector<128x384xbf16>
    %c2 = arith.constant 2 : index
    %c0_20 = arith.constant 0 : index
    %c0_21 = arith.constant 0 : index
    %39 = vector.load %arg3[%c2, %c0_20, %c0_21] : memref<3x384x128xbf16, #tpu.memory_space<vmem>>, vector<1x384x128xbf16>
    %40 = vector.shape_cast %39 : vector<1x384x128xbf16> to vector<384x128xbf16>
    %cst_22 = arith.constant dense<0.000000e+00> : vector<128x128xf32>
    %41 = tpu.matmul %38, %40, %cst_22 {dimension_numbers = #tpu.dot_dimension_numbers<[1], [0], [0], [1], [0, 0, 1, 1], [], []>} : vector<128x384xbf16>, vector<384x128xbf16>, vector<128x128xf32> -> vector<128x128xf32>
    %c0_23 = arith.constant 0 : index
    %c0_24 = arith.constant 0 : index
    %42 = vector.load %arg6[%c0_23, %c0_24] : memref<128x128xf32, #tpu.memory_space<vmem>>, vector<128x128xf32>
    %43 = arith.addf %42, %41 : vector<128x128xf32>
    %c0_25 = arith.constant 0 : index
    %c0_26 = arith.constant 0 : index
    %44 = vector.load %arg6[%c0_25, %c0_26] : memref<128x128xf32, #tpu.memory_space<vmem>>, vector<128x128xf32>
    tpu.vector_store %arg6[%c0_25, %c0_26], %43 {strides = array<i32>} : memref<128x128xf32, #tpu.memory_space<vmem>>, vector<128x128xf32>,
    %c0_27 = arith.constant 0 : index
    %c0_28 = arith.constant 0 : index
    %45 = vector.load %arg6[%c0_27, %c0_28] : memref<128x128xf32, #tpu.memory_space<vmem>>, vector<128x128xf32>
    %c0_29 = arith.constant 0 : index
    %c0_30 = arith.constant 0 : index
    %46 = vector.load %arg4[%c0_29, %c0_30] : memref<1x128xf32, #tpu.memory_space<vmem>>, vector<1x128xf32>
    %47 = vector.broadcast %46 : vector<1x128xf32> to vector<128x128xf32>
    %48 = arith.addf %45, %47 : vector<128x128xf32>
    %cst_31 = arith.constant 0.000000e+00 : f32
    %49 = vector.broadcast %cst_31 : f32 to vector<128x128xf32>
    %50 = arith.maximumf %48, %49 : vector<128x128xf32>
    %51 = vector.shape_cast %50 : vector<128x128xf32> to vector<8x16x128xf32>
    %c0_32 = arith.constant 0 : index
    %c0_33 = arith.constant 0 : index
    %c0_34 = arith.constant 0 : index
    %c0_35 = arith.constant 0 : index
    %52 = vector.load %arg5[%c0_32, %c0_33, %c0_34, %c0_35] : memref<1x8x16x128xf32, #tpu.memory_space<vmem>>, vector<1x8x16x128xf32>
    %53 = vector.shape_cast %52 : vector<1x8x16x128xf32> to vector<8x16x128xf32>
    %54 = vector.shape_cast %51 : vector<8x16x128xf32> to vector<1x8x16x128xf32>
    tpu.vector_store %arg5[%c0_32, %c0_33, %c0_34, %c0_35], %54 {strides = array<i32>} : memref<1x8x16x128xf32, #tpu.memory_space<vmem>>, vector<1x8x16x128xf32>,
    return
  }
  func.func @transform_0(%arg0: i32, %arg1: i32) -> (i32, i32, i32, i32) {
    %c0_i32 = arith.constant 0 : i32
    %c0_i32_0 = arith.constant 0 : i32
    %c0_i32_1 = arith.constant 0 : i32
    %c0_i32_2 = arith.constant 0 : i32
    return %arg0, %c0_i32, %c0_i32_0, %c0_i32_1 : i32, i32, i32, i32
  }
  func.func @transform_1(%arg0: i32, %arg1: i32) -> (i32, i32, i32) {
    %c0_i32 = arith.constant 0 : i32
    %c0_i32_0 = arith.constant 0 : i32
    %c0_i32_1 = arith.constant 0 : i32
    %c0_i32_2 = arith.constant 0 : i32
    return %c0_i32, %c0_i32_0, %c0_i32_1 : i32, i32, i32
  }
  func.func @transform_2(%arg0: i32, %arg1: i32) -> (i32, i32) {
    %c0_i32 = arith.constant 0 : i32
    %c0_i32_0 = arith.constant 0 : i32
    %c0_i32_1 = arith.constant 0 : i32
    return %c0_i32, %c0_i32_0 : i32, i32
  }
  func.func @transform_3(%arg0: i32, %arg1: i32) -> (i32, i32, i32, i32) {
    %c0_i32 = arith.constant 0 : i32
    %c0_i32_0 = arith.constant 0 : i32
    %c0_i32_1 = arith.constant 0 : i32
    return %arg0, %arg1, %c0_i32, %c0_i32_0 : i32, i32, i32, i32
  }
}

</mosaic_0001>

<llo_original>
// kernel: tpu_custom_call.1
$region0: #{tpu_custom_call.1}
  #allocation0 [shape = 'u32[]', space=smem, size = 0x4, offset = 0x4, fixed_abs, tag = 'smem constant byte address 0x4 - core index']
  #allocation1 [shape = 'u32[144,128]{1,0:T(1,128)}', space=vmem, size = 0x12000, scoped, tag = 'internal scratch']
  #allocation2 [shape = 'f32[128,128]{1,0:T(8,128)}', space=vmem, size = 0x10000, scoped, tag = 'scratch operand']
  %s0 = inlined_call_operand.vmem [shape: bf16[2,18,18,128], index: 0, kind: input, shape index: {}]
  %s1 = inlined_call_operand.vmem [shape: bf16[3,384,128], index: 1, kind: input, shape index: {}]
  %s2 = inlined_call_operand.vmem [shape: f32[1,128], index: 2, kind: input, shape index: {}]
  %s3 = inlined_call_operand.hbm [shape: f32[2,16,16,128], index: 3, kind: output, shape index: {}]
  %s4 = sld [smem:[#allocation0]]
  $region45: #{tpu_custom_call.1} parent=0
    _
  %s6 = ssub.s32 1, %s4
  %s7 = scalar_select 0, %s6, %s4
  $region1: #{tpu_custom_call.1} parent=0
    #allocation3 [shape = 'u8[131072]{0}', space=vmem, size = 0x20000, scoped, tag = 'output window, operand 0']
    #allocation4 [shape = 's32[2]{0}', space=sflag, size = 0x8, scoped, tag = 'scoped memory for tpu_custom_call.1']
    %8 = vsyncpa [#allocation4], 0
    %s9 = scalar_lea.sflag [#allocation4], 1
    %10 = vsyncpa %s9, 0
    loop: start=0, step=1, limit=6
    $region2: #{tpu_custom_call.1} parent=1 // loop_pre_header
      _
    $region3: #{tpu_custom_call.1} parent=1 // loop_header
      %s12 = sphi 0, %s16
      %p13 = scmp.ge.s32.totalorder %s12, 6
      %s19 = sphi 0, %s31
      %s20 = sphi 0, %s27
      %s21 = sphi 0, %s19
      %s22 = sphi 0, %s20
      %s23 = sphi 0, %s21
      %s24 = sphi 0, %s22
      %s34 = sphi 0, %s36
      %s37 = sphi 0, %s34
      %s38 = sphi 0, %s37
      %s54 = sphi 0, %s38
      %s58 = sphi 0, %s58
      %s60 = sphi 0, %s58
      %s61 = sphi 0, %s60
      %s75 = sphi 0, %s61
      %s79 = sphi 0, %s79
      %s81 = sphi 0, %s79
      %s82 = sphi 0, %s81
      %s96 = sphi 0, %s82
      %s104 = sphi 0, %s106
      %s107 = sphi 0, %s104
      %s108 = sphi 0, %s107
      %s124 = sphi 0, %s108
    $region4: #{tpu_custom_call.1} parent=1 // loop_header_branch
      %15 = sbr.rel (%p13) target = $region8
    $region5: #{tpu_custom_call.1} parent=1 // loop_body
      %s17 = ssub.s32 %s12, 1
      %s18 = ssub.s32 %s12, 2
      %s25 = sadd.s32 1, %s20
      %p26 = scmp.ge.s32.totalorder %s25, 2
      %s27 = scalar_select %p26, 0, %s25
      %s28 = sadd.s32 1, %s19
      %s29 = scalar_select %p26, %s28, %s19
      %p30 = scmp.ge.s32.totalorder %s29, 2
      %s31 = scalar_select %p30, 0, %s29
      %s32 = ssub.s32 %s19, %s31
      %p33 = scmp.eq.s32.totalorder %s32, 0
      %s35 = sadd.s32 %s34, 1
      %s36 = scalar_select %p33, %s34, %s35
      %p39 = pneg %p33
      %p40 = scmp.eq.s32.totalorder %s12, 3
      %p41 = por %p39, %p40
      %p42 = scmp.ne.s32.totalorder %s34, %s37
      %p43 = scmp.eq.s32.totalorder %s12, 0
      %p44 = por %p42, %p43
      %p45 = scmp.ne.s32.totalorder %s34, %s37
      %p46 = scmp.eq.s32.totalorder %s17, 3
      %p47 = por %p45, %p46
      %p48 = scmp.ne.s32.totalorder %s37, %s38
      %p49 = scmp.eq.s32.totalorder %s17, 0
      %p50 = por %p48, %p49
      %p51 = scmp.ne.s32.totalorder %s37, %s38
      %p52 = scmp.eq.s32.totalorder %s18, 3
      %p53 = por %p51, %p52
      %p55 = scmp.ne.s32.totalorder %s38, %s54
      %p56 = scmp.eq.s32.totalorder %s18, 0
      %p57 = por %p55, %p56
      %s59 = sadd.s32 %s58, 1
      %p62 = scmp.eq.s32.totalorder %s12, 3
      %p63 = scmp.ne.s32.totalorder %s58, %s60
      %p64 = scmp.eq.s32.totalorder %s12, 0
      %p65 = por %p63, %p64
      %p66 = scmp.ne.s32.totalorder %s58, %s60
      %p67 = scmp.eq.s32.totalorder %s17, 3
      %p68 = por %p66, %p67
      %p69 = scmp.ne.s32.totalorder %s60, %s61
      %p70 = scmp.eq.s32.totalorder %s17, 0
      %p71 = por %p69, %p70
      %p72 = scmp.ne.s32.totalorder %s60, %s61
      %p73 = scmp.eq.s32.totalorder %s18, 3
      %p74 = por %p72, %p73
      %p76 = scmp.ne.s32.totalorder %s61, %s75
      %p77 = scmp.eq.s32.totalorder %s18, 0
      %p78 = por %p76, %p77
      %s80 = sadd.s32 %s79, 1
      %p83 = scmp.eq.s32.totalorder %s12, 3
      %p84 = scmp.ne.s32.totalorder %s79, %s81
      %p85 = scmp.eq.s32.totalorder %s12, 0
      %p86 = por %p84, %p85
      %p87 = scmp.ne.s32.totalorder %s79, %s81
      %p88 = scmp.eq.s32.totalorder %s17, 3
      %p89 = por %p87, %p88
      %p90 = scmp.ne.s32.totalorder %s81, %s82
      %p91 = scmp.eq.s32.totalorder %s17, 0
      %p92 = por %p90, %p91
      %p93 = scmp.ne.s32.totalorder %s81, %s82
      %p94 = scmp.eq.s32.totalorder %s18, 3
      %p95 = por %p93, %p94
      %p97 = scmp.ne.s32.totalorder %s82, %s96
      %p98 = scmp.eq.s32.totalorder %s18, 0
      %p99 = por %p97, %p98
      %s100 = ssub.s32 %s19, %s31
      %s101 = ssub.s32 %s20, %s27
      %s102 = sor.u32 %s100, %s101
      %p103 = scmp.eq.s32.totalorder %s102, 0
      %s105 = sadd.s32 %s104, 1
      %s106 = scalar_select %p103, %s104, %s105
      %p109 = pneg %p103
      %p110 = scmp.eq.s32.totalorder %s12, 3
      %p111 = por %p109, %p110
      %p112 = scmp.ne.s32.totalorder %s104, %s107
      %p113 = scmp.eq.s32.totalorder %s12, 0
      %p114 = por %p112, %p113
      %p115 = scmp.ne.s32.totalorder %s104, %s107
      %p116 = scmp.eq.s32.totalorder %s17, 3
      %p117 = por %p115, %p116
      %p118 = scmp.ne.s32.totalorder %s107, %s108
      %p119 = scmp.eq.s32.totalorder %s17, 0
      %p120 = por %p118, %p119
      %p121 = scmp.ne.s32.totalorder %s107, %s108
      %p122 = scmp.eq.s32.totalorder %s18, 3
      %p123 = por %p121, %p122
      %p125 = scmp.ne.s32.totalorder %s108, %s124
      %p126 = scmp.eq.s32.totalorder %s18, 0
      %p127 = por %p125, %p126
      %p128 = scmp.le.s32.totalorder 1, %s12
      %p129 = scmp.lt.s32.totalorder %s12, 5
      %p130 = pnand %p128, %p129
      %p131 = pneg %p130
      // Predicated region
      $region9: #{tpu_custom_call.1} parent=5 // pred_check
        _
      $region10: #{tpu_custom_call.1} parent=5 // pred_check_branch
        %133 = sbr.rel (%p130) target = $region12
      $region11: #{tpu_custom_call.1} parent=5 // pred_region
        %s134 = ssub.s32 %s12, 1
        // Predicated region
        $region13: #{tpu_custom_call.1} parent=11 // pred_check
          %p135 = pneg %p71
        $region14: #{tpu_custom_call.1} parent=11 // pred_check_branch
          %137 = sbr.rel (%p135) target = $region16
        $region15: #{tpu_custom_call.1} parent=11 // pred_region
          _
        $region16: #{tpu_custom_call.1} parent=11 // pred_fallthru
          _
        // Predicated region
        $region17: #{tpu_custom_call.1} parent=11 // pred_check
          %p138 = pneg %p92
        $region18: #{tpu_custom_call.1} parent=11 // pred_check_branch
          %140 = sbr.rel (%p138) target = $region20
        $region19: #{tpu_custom_call.1} parent=11 // pred_region
          _
        $region20: #{tpu_custom_call.1} parent=11 // pred_fallthru
          _
      $region12: #{tpu_custom_call.1} parent=5 // pred_fallthru
        _
      %p141 = scmp.lt.s32.totalorder %s12, 4
      // Predicated region
      $region21: #{tpu_custom_call.1} parent=5 // pred_check
        %p142 = pneg %p141
      $region22: #{tpu_custom_call.1} parent=5 // pred_check_branch
        %144 = sbr.rel (%p142) target = $region24
      $region23: #{tpu_custom_call.1} parent=5 // pred_region
        // Predicated region
        $region25: #{tpu_custom_call.1} parent=23 // pred_check
          %p145 = pneg %p44
        $region26: #{tpu_custom_call.1} parent=23 // pred_check_branch
          %147 = sbr.rel (%p145) target = $region28
        $region27: #{tpu_custom_call.1} parent=23 // pred_region
          %p148 = scmp.lt.s32.totalorder %s19, 1
          %s149 = scalar_select %p148, %s19, 1
          %s150 = smul.addr %s149, 54
          %s151 = smul.addr %s150, 4
          %s152 = scalar_lea.vmem %s0, %s151
        $region28: #{tpu_custom_call.1} parent=23 // pred_fallthru
          _
      $region24: #{tpu_custom_call.1} parent=5 // pred_fallthru
        _
      %p153 = scmp.le.s32.totalorder 1, %s12
      %p154 = scmp.lt.s32.totalorder %s12, 5
      %p155 = pnand %p153, %p154
      %p156 = pneg %p155
      // Predicated region
      $region29: #{tpu_custom_call.1} parent=5 // pred_check
        _
      $region30: #{tpu_custom_call.1} parent=5 // pred_check_branch
        %158 = sbr.rel (%p155) target = $region32
      $region31: #{tpu_custom_call.1} parent=5 // pred_region
        %s159 = ssub.s32 %s12, 1
        %p160 = scmp.lt.s32.totalorder %s21, 1
        %s161 = scalar_select %p160, %s21, 1
        %s162 = smul.addr %s161, 54
        %s163 = smul.addr %s162, 4
        %s164 = scalar_lea.vmem %s0, %s163
        %p165 = pneg %p50
        %p166 = pneg %p47
        %p167 = pneg %p71
        %p168 = pneg %p68
        %p169 = pneg %p92
        %p170 = pneg %p89
        %p171 = pneg %p120
        %p172 = pneg %p117
        %s173 = sand.u32 %s107, 1
        %s174 = scalar_lea.sflag [#allocation4], %s173
        %s175 = sand.u32 %s107, 1
        %s176 = smul.addr %s175, 128
        %s177 = scalar_lea.vmem [#allocation3], %s176
        %p178 = scmp.lt.s32.totalorder %s21, 1
        %s179 = scalar_select %p178, %s21, 1
        %s180 = smul.addr %s179, 54
        %s181 = smul.addr %s180, 4
        %s182 = scalar_lea.vmem %s0, %s181
        %s183 = smul.u32 8, %s22
        %s185 = smul.u32 %s22, 8
        %s186 = smul.u32 %s185, 3
        %s187 = smul.addr %s186, 4
        %s188 = scalar_lea.vmem %s182, %s187
        %v189 = vld [vmem:[%s188] sm:$0xf]
        %v190 = vld [vmem:[%s188 + $0x4] sm:$0xf]
        %v191 = vld [vmem:[%s188 + $0x8] sm:$0x1]
        %v192 = vld [vmem:[%s188 + $0xc] sm:$0xf]
        %v193 = vld [vmem:[%s188 + $0x10] sm:$0xf]
        %v194 = vld [vmem:[%s188 + $0x14] sm:$0x1]
        %v195 = vld [vmem:[%s188 + $0x18] sm:$0xf]
        %v196 = vld [vmem:[%s188 + $0x1c] sm:$0xf]
        %v197 = vld [vmem:[%s188 + $0x20] sm:$0x1]
        %v198 = vld [vmem:[%s188 + $0x24] sm:$0xf]
        %v199 = vld [vmem:[%s188 + $0x28] sm:$0xf]
        %v200 = vld [vmem:[%s188 + $0x2c] sm:$0x1]
        %v201 = vld [vmem:[%s188 + $0x30] sm:$0xf]
        %v202 = vld [vmem:[%s188 + $0x34] sm:$0xf]
        %v203 = vld [vmem:[%s188 + $0x38] sm:$0x1]
        %v204 = vld [vmem:[%s188 + $0x3c] sm:$0xf]
        %v205 = vld [vmem:[%s188 + $0x40] sm:$0xf]
        %v206 = vld [vmem:[%s188 + $0x44] sm:$0x1]
        %v207 = vld [vmem:[%s188 + $0x48] sm:$0xf]
        %v208 = vld [vmem:[%s188 + $0x4c] sm:$0xf]
        %v209 = vld [vmem:[%s188 + $0x50] sm:$0x1]
        %v210 = vld [vmem:[%s188 + $0x54] sm:$0xf]
        %v211 = vld [vmem:[%s188 + $0x58] sm:$0xf]
        %v212 = vld [vmem:[%s188 + $0x5c] sm:$0x1]
        %v229 = vunpack.c.l.b16 %v189
        %v230 = vunpack.c.l.b16 %v190
        %v231 = vunpack.c.l.b16 %v192
        %v232 = vunpack.c.l.b16 %v193
        %v233 = vunpack.c.l.b16 %v195
        %v234 = vunpack.c.l.b16 %v196
        %v235 = vunpack.c.l.b16 %v198
        %v236 = vunpack.c.l.b16 %v199
        %v237 = vunpack.c.l.b16 %v201
        %v238 = vunpack.c.l.b16 %v202
        %v239 = vunpack.c.l.b16 %v204
        %v240 = vunpack.c.l.b16 %v205
        %v241 = vunpack.c.l.b16 %v207
        %v242 = vunpack.c.l.b16 %v208
        %v243 = vunpack.c.l.b16 %v210
        %v244 = vunpack.c.l.b16 %v211
        %v245 = vpack.c.b16 %v230, %v229
        %v246 = vpack.c.b16 %v232, %v231
        %v247 = vpack.c.b16 %v234, %v233
        %v248 = vpack.c.b16 %v236, %v235
        %v249 = vpack.c.b16 %v238, %v237
        %v250 = vpack.c.b16 %v240, %v239
        %v251 = vpack.c.b16 %v242, %v241
        %v252 = vpack.c.b16 %v244, %v243
        %v269 = vunpack.c.l.b16 %v191
        %v270 = vunpack.c.l.b16 %v194
        %v271 = vunpack.c.l.b16 %v197
        %v272 = vunpack.c.l.b16 %v200
        %v273 = vunpack.c.l.b16 %v203
        %v274 = vunpack.c.l.b16 %v206
        %v275 = vunpack.c.l.b16 %v209
        %v276 = vunpack.c.l.b16 %v212
        %v277 = vpack.c.b16 %v269, %v269
        %v278 = vpack.c.b16 %v270, %v270
        %v279 = vpack.c.b16 %v271, %v271
        %v280 = vpack.c.b16 %v272, %v272
        %v281 = vpack.c.b16 %v273, %v273
        %v282 = vpack.c.b16 %v274, %v274
        %v283 = vpack.c.b16 %v275, %v275
        %v284 = vpack.c.b16 %v276, %v276
        %vm285 = vsmask.f32 7424
        %v287 = vshrl.u32 %v245, 16
        %v289 = vshll.u32 %v245, 16
        %v291 = vrot.slane %v289, 1
        %v292 = vor.u32 %v287, %v291
        %v294 = vshll.u32 %v277, 16
        %v296 = vrot.slane %v294, 1
        %v297 = vsel %vm285, %v292, %v296
        %v299 = vshrl.u32 %v246, 16
        %v301 = vshll.u32 %v246, 16
        %v303 = vrot.slane %v301, 1
        %v304 = vor.u32 %v299, %v303
        %v306 = vshll.u32 %v278, 16
        %v308 = vrot.slane %v306, 1
        %v309 = vsel %vm285, %v304, %v308
        %v311 = vshrl.u32 %v247, 16
        %v313 = vshll.u32 %v247, 16
        %v315 = vrot.slane %v313, 1
        %v316 = vor.u32 %v311, %v315
        %v318 = vshll.u32 %v279, 16
        %v320 = vrot.slane %v318, 1
        %v321 = vsel %vm285, %v316, %v320
        %v323 = vshrl.u32 %v248, 16
        %v325 = vshll.u32 %v248, 16
        %v327 = vrot.slane %v325, 1
        %v328 = vor.u32 %v323, %v327
        %v330 = vshll.u32 %v280, 16
        %v332 = vrot.slane %v330, 1
        %v333 = vsel %vm285, %v328, %v332
        %v335 = vshrl.u32 %v249, 16
        %v337 = vshll.u32 %v249, 16
        %v339 = vrot.slane %v337, 1
        %v340 = vor.u32 %v335, %v339
        %v342 = vshll.u32 %v281, 16
        %v344 = vrot.slane %v342, 1
        %v345 = vsel %vm285, %v340, %v344
        %v347 = vshrl.u32 %v250, 16
        %v349 = vshll.u32 %v250, 16
        %v351 = vrot.slane %v349, 1
        %v352 = vor.u32 %v347, %v351
        %v354 = vshll.u32 %v282, 16
        %v356 = vrot.slane %v354, 1
        %v357 = vsel %vm285, %v352, %v356
        %v359 = vshrl.u32 %v251, 16
        %v361 = vshll.u32 %v251, 16
        %v363 = vrot.slane %v361, 1
        %v364 = vor.u32 %v359, %v363
        %v366 = vshll.u32 %v283, 16
        %v368 = vrot.slane %v366, 1
        %v369 = vsel %vm285, %v364, %v368
        %v371 = vshrl.u32 %v252, 16
        %v373 = vshll.u32 %v252, 16
        %v375 = vrot.slane %v373, 1
        %v376 = vor.u32 %v371, %v375
        %v378 = vshll.u32 %v284, 16
        %v380 = vrot.slane %v378, 1
        %v381 = vsel %vm285, %v376, %v380
        %vm390 = vcmask 1046528
        %v391 = vrot.slane %v245, 1
        %v392 = vrot.slane %v277, 1
        %v393 = vsel %vm390, %v391, %v392
        %v394 = vrot.slane %v246, 1
        %v395 = vrot.slane %v278, 1
        %v396 = vsel %vm390, %v394, %v395
        %v397 = vrot.slane %v247, 1
        %v398 = vrot.slane %v279, 1
        %v399 = vsel %vm390, %v397, %v398
        %v400 = vrot.slane %v248, 1
        %v401 = vrot.slane %v280, 1
        %v402 = vsel %vm390, %v400, %v401
        %v403 = vrot.slane %v249, 1
        %v404 = vrot.slane %v281, 1
        %v405 = vsel %vm390, %v403, %v404
        %v406 = vrot.slane %v250, 1
        %v407 = vrot.slane %v282, 1
        %v408 = vsel %vm390, %v406, %v407
        %v409 = vrot.slane %v251, 1
        %v410 = vrot.slane %v283, 1
        %v411 = vsel %vm390, %v409, %v410
        %v412 = vrot.slane %v252, 1
        %v413 = vrot.slane %v284, 1
        %v414 = vsel %vm390, %v412, %v413
        %v423 = vld [vmem:[%s1] sm:$0xf]
        %v424 = vld [vmem:[%s1 + $0x4] sm:$0xf]
        %v425 = vld [vmem:[%s1 + $0x8] sm:$0xf]
        %v426 = vld [vmem:[%s1 + $0xc] sm:$0xf]
        %v427 = vld [vmem:[%s1 + $0x10] sm:$0xf]
        %v428 = vld [vmem:[%s1 + $0x14] sm:$0xf]
        %v429 = vld [vmem:[%s1 + $0x18] sm:$0xf]
        %v430 = vld [vmem:[%s1 + $0x1c] sm:$0xf]
        %v431 = vld [vmem:[%s1 + $0x20] sm:$0xf]
        %v432 = vld [vmem:[%s1 + $0x24] sm:$0xf]
        %v433 = vld [vmem:[%s1 + $0x28] sm:$0xf]
        %v434 = vld [vmem:[%s1 + $0x2c] sm:$0xf]
        %v435 = vld [vmem:[%s1 + $0x30] sm:$0xf]
        %v436 = vld [vmem:[%s1 + $0x34] sm:$0xf]
        %v437 = vld [vmem:[%s1 + $0x38] sm:$0xf]
        %v438 = vld [vmem:[%s1 + $0x3c] sm:$0xf]
        %v439 = vld [vmem:[%s1 + $0x40] sm:$0xf]
        %v440 = vld [vmem:[%s1 + $0x44] sm:$0xf]
        %v441 = vld [vmem:[%s1 + $0x48] sm:$0xf]
        %v442 = vld [vmem:[%s1 + $0x4c] sm:$0xf]
        %v443 = vld [vmem:[%s1 + $0x50] sm:$0xf]
        %v444 = vld [vmem:[%s1 + $0x54] sm:$0xf]
        %v445 = vld [vmem:[%s1 + $0x58] sm:$0xf]
        %v446 = vld [vmem:[%s1 + $0x5c] sm:$0xf]
        %v447 = vld [vmem:[%s1 + $0x60] sm:$0xf]
        %v448 = vld [vmem:[%s1 + $0x64] sm:$0xf]
        %v449 = vld [vmem:[%s1 + $0x68] sm:$0xf]
        %v450 = vld [vmem:[%s1 + $0x6c] sm:$0xf]
        %v451 = vld [vmem:[%s1 + $0x70] sm:$0xf]
        %v452 = vld [vmem:[%s1 + $0x74] sm:$0xf]
        %v453 = vld [vmem:[%s1 + $0x78] sm:$0xf]
        %v454 = vld [vmem:[%s1 + $0x7c] sm:$0xf]
        %v455 = vld [vmem:[%s1 + $0x80] sm:$0xf]
        %v456 = vld [vmem:[%s1 + $0x84] sm:$0xf]
        %v457 = vld [vmem:[%s1 + $0x88] sm:$0xf]
        %v458 = vld [vmem:[%s1 + $0x8c] sm:$0xf]
        %v459 = vld [vmem:[%s1 + $0x90] sm:$0xf]
        %v460 = vld [vmem:[%s1 + $0x94] sm:$0xf]
        %v461 = vld [vmem:[%s1 + $0x98] sm:$0xf]
        %v462 = vld [vmem:[%s1 + $0x9c] sm:$0xf]
        %v463 = vld [vmem:[%s1 + $0xa0] sm:$0xf]
        %v464 = vld [vmem:[%s1 + $0xa4] sm:$0xf]
        %v465 = vld [vmem:[%s1 + $0xa8] sm:$0xf]
        %v466 = vld [vmem:[%s1 + $0xac] sm:$0xf]
        %v467 = vld [vmem:[%s1 + $0xb0] sm:$0xf]
        %v468 = vld [vmem:[%s1 + $0xb4] sm:$0xf]
        %v469 = vld [vmem:[%s1 + $0xb8] sm:$0xf]
        %v470 = vld [vmem:[%s1 + $0xbc] sm:$0xf]
        %v519 = vunpack.c.l.b16 %v423
        %v520 = vunpack.c.l.b16 %v424
        %v521 = vunpack.c.l.b16 %v425
        %v522 = vunpack.c.l.b16 %v426
        %v523 = vunpack.c.l.b16 %v427
        %v524 = vunpack.c.l.b16 %v428
        %v525 = vunpack.c.l.b16 %v429
        %v526 = vunpack.c.l.b16 %v430
        %v527 = vunpack.c.l.b16 %v431
        %v528 = vunpack.c.l.b16 %v432
        %v529 = vunpack.c.l.b16 %v433
        %v530 = vunpack.c.l.b16 %v434
        %v531 = vunpack.c.l.b16 %v435
        %v532 = vunpack.c.l.b16 %v436
        %v533 = vunpack.c.l.b16 %v437
        %v534 = vunpack.c.l.b16 %v438
        %v535 = vunpack.c.l.b16 %v439
        %v536 = vunpack.c.l.b16 %v440
        %v537 = vunpack.c.l.b16 %v441
        %v538 = vunpack.c.l.b16 %v442
        %v539 = vunpack.c.l.b16 %v443
        %v540 = vunpack.c.l.b16 %v444
        %v541 = vunpack.c.l.b16 %v445
        %v542 = vunpack.c.l.b16 %v446
        %v543 = vunpack.c.l.b16 %v447
        %v544 = vunpack.c.l.b16 %v448
        %v545 = vunpack.c.l.b16 %v449
        %v546 = vunpack.c.l.b16 %v450
        %v547 = vunpack.c.l.b16 %v451
        %v548 = vunpack.c.l.b16 %v452
        %v549 = vunpack.c.l.b16 %v453
        %v550 = vunpack.c.l.b16 %v454
        %v551 = vunpack.c.l.b16 %v455
        %v552 = vunpack.c.l.b16 %v456
        %v553 = vunpack.c.l.b16 %v457
        %v554 = vunpack.c.l.b16 %v458
        %v555 = vunpack.c.l.b16 %v459
        %v556 = vunpack.c.l.b16 %v460
        %v557 = vunpack.c.l.b16 %v461
        %v558 = vunpack.c.l.b16 %v462
        %v559 = vunpack.c.l.b16 %v463
        %v560 = vunpack.c.l.b16 %v464
        %v561 = vunpack.c.l.b16 %v465
        %v562 = vunpack.c.l.b16 %v466
        %v563 = vunpack.c.l.b16 %v467
        %v564 = vunpack.c.l.b16 %v468
        %v565 = vunpack.c.l.b16 %v469
        %v566 = vunpack.c.l.b16 %v470
        %v567 = vpack.c.b16 %v520, %v519
        %v568 = vpack.c.b16 %v522, %v521
        %v569 = vpack.c.b16 %v524, %v523
        %v570 = vpack.c.b16 %v526, %v525
        %v571 = vpack.c.b16 %v528, %v527
        %v572 = vpack.c.b16 %v530, %v529
        %v573 = vpack.c.b16 %v532, %v531
        %v574 = vpack.c.b16 %v534, %v533
        %v575 = vpack.c.b16 %v536, %v535
        %v576 = vpack.c.b16 %v538, %v537
        %v577 = vpack.c.b16 %v540, %v539
        %v578 = vpack.c.b16 %v542, %v541
        %v579 = vpack.c.b16 %v544, %v543
        %v580 = vpack.c.b16 %v546, %v545
        %v581 = vpack.c.b16 %v548, %v547
        %v582 = vpack.c.b16 %v550, %v549
        %v583 = vpack.c.b16 %v552, %v551
        %v584 = vpack.c.b16 %v554, %v553
        %v585 = vpack.c.b16 %v556, %v555
        %v586 = vpack.c.b16 %v558, %v557
        %v587 = vpack.c.b16 %v560, %v559
        %v588 = vpack.c.b16 %v562, %v561
        %v589 = vpack.c.b16 %v564, %v563
        %v590 = vpack.c.b16 %v566, %v565
        %615 = vmatprep.subr.bf16.mxu0 0
        %616 = vmatpush1.bf16.msra.mxu0 %v574
        %617 = vmatprep.subr.bf16.mxu0 0
        %618 = vmatpush1.bf16.msra.mxu0 %v573
        %619 = vmatprep.subr.bf16.mxu0 0
        %620 = vmatpush1.bf16.msra.mxu0 %v572
        %621 = vmatprep.subr.bf16.mxu0 0
        %622 = vmatpush1.bf16.msra.mxu0 %v571
        %623 = vmatprep.subr.bf16.mxu0 0
        %624 = vmatpush1.bf16.msra.mxu0 %v570
        %625 = vmatprep.subr.bf16.mxu0 0
        %626 = vmatpush1.bf16.msra.mxu0 %v569
        %627 = vmatprep.subr.bf16.mxu0 0
        %628 = vmatpush1.bf16.msra.mxu0 %v568
        %629 = vmatprep.subr.bf16.mxu0 0
        %630 = vmatpush1.bf16.msra.mxu0 %v567
        %631 = vmatprep.subr.bf16.mxu0 0
        %632 = vmatpush2.bf16.msra.mxu0 %v582
        %633 = vmatprep.subr.bf16.mxu0 0
        %634 = vmatpush2.bf16.msra.mxu0 %v581
        %635 = vmatprep.subr.bf16.mxu0 0
        %636 = vmatpush2.bf16.msra.mxu0 %v580
        %637 = vmatprep.subr.bf16.mxu0 0
        %638 = vmatpush2.bf16.msra.mxu0 %v579
        %639 = vmatprep.subr.bf16.mxu0 0
        %640 = vmatpush2.bf16.msra.mxu0 %v578
        %641 = vmatprep.subr.bf16.mxu0 0
        %642 = vmatpush2.bf16.msra.mxu0 %v577
        %643 = vmatprep.subr.bf16.mxu0 0
        %644 = vmatpush2.bf16.msra.mxu0 %v576
        %645 = vmatprep.subr.bf16.mxu0 0
        %646 = vmatpush2.bf16.msra.mxu0 %v575
        %647 = vmatprep.mubr.bf16.mxu0 %v297
        %648 = vmatmul.mubr.bf16.gmra.mxu0 %v245
        %v649 = vpop.f32.mrf.mxu0
        %v650 = vadd.f32 0.0, %v649
        %v651 = vpop.f32.mrf.mxu0
        %v652 = vpop.f32.mrf.mxu0
        %v653 = vadd.f32 0.0, %v652
        %v654 = vpop.f32.mrf.mxu0
        %655 = vmatprep.mubr.bf16.mxu0 %v309
        %656 = vmatmul.mubr.bf16.gmra.mxu0 %v246
        %v657 = vpop.f32.mrf.mxu0
        %v658 = vadd.f32 0.0, %v657
        %v659 = vpop.f32.mrf.mxu0
        %v660 = vpop.f32.mrf.mxu0
        %v661 = vadd.f32 0.0, %v660
        %v662 = vpop.f32.mrf.mxu0
        %663 = vmatprep.mubr.bf16.mxu0 %v321
        %664 = vmatmul.mubr.bf16.gmra.mxu0 %v247
        %v665 = vpop.f32.mrf.mxu0
        %v666 = vadd.f32 0.0, %v665
        %v667 = vpop.f32.mrf.mxu0
        %v668 = vpop.f32.mrf.mxu0
        %v669 = vadd.f32 0.0, %v668
        %v670 = vpop.f32.mrf.mxu0
        %671 = vmatprep.mubr.bf16.mxu0 %v333
        %672 = vmatmul.mubr.bf16.gmra.mxu0 %v248
        %v673 = vpop.f32.mrf.mxu0
        %v674 = vadd.f32 0.0, %v673
        %v675 = vpop.f32.mrf.mxu0
        %v676 = vpop.f32.mrf.mxu0
        %v677 = vadd.f32 0.0, %v676
        %v678 = vpop.f32.mrf.mxu0
        %679 = vmatprep.mubr.bf16.mxu0 %v345
        %680 = vmatmul.mubr.bf16.gmra.mxu0 %v249
        %v681 = vpop.f32.mrf.mxu0
        %v682 = vadd.f32 0.0, %v681
        %v683 = vpop.f32.mrf.mxu0
        %v684 = vpop.f32.mrf.mxu0
        %v685 = vadd.f32 0.0, %v684
        %v686 = vpop.f32.mrf.mxu0
        %687 = vmatprep.mubr.bf16.mxu0 %v357
        %688 = vmatmul.mubr.bf16.gmra.mxu0 %v250
        %v689 = vpop.f32.mrf.mxu0
        %v690 = vadd.f32 0.0, %v689
        %v691 = vpop.f32.mrf.mxu0
        %v692 = vpop.f32.mrf.mxu0
        %v693 = vadd.f32 0.0, %v692
        %v694 = vpop.f32.mrf.mxu0
        %695 = vmatprep.mubr.bf16.mxu0 %v369
        %696 = vmatmul.mubr.bf16.gmra.mxu0 %v251
        %v697 = vpop.f32.mrf.mxu0
        %v698 = vadd.f32 0.0, %v697
        %v699 = vpop.f32.mrf.mxu0
        %v700 = vpop.f32.mrf.mxu0
        %v701 = vadd.f32 0.0, %v700
        %v702 = vpop.f32.mrf.mxu0
        %703 = vmatprep.mubr.bf16.mxu0 %v381
        %704 = vmatmul.mubr.bf16.gmra.mxu0 %v252
        %v705 = vpop.f32.mrf.mxu0
        %v706 = vadd.f32 0.0, %v705
        %v707 = vpop.f32.mrf.mxu0
        %v708 = vpop.f32.mrf.mxu0
        %v709 = vadd.f32 0.0, %v708
        %v710 = vpop.f32.mrf.mxu0
        %711 = vdwg.mxu0
        %712 = vmatprep.subr.bf16.mxu0 0
        %713 = vmatpush1.bf16.msra.mxu0 %v590
        %714 = vmatprep.subr.bf16.mxu0 0
        %715 = vmatpush1.bf16.msra.mxu0 %v589
        %716 = vmatprep.subr.bf16.mxu0 0
        %717 = vmatpush1.bf16.msra.mxu0 %v588
        %718 = vmatprep.subr.bf16.mxu0 0
        %719 = vmatpush1.bf16.msra.mxu0 %v587
        %720 = vmatprep.subr.bf16.mxu0 0
        %721 = vmatpush1.bf16.msra.mxu0 %v586
        %722 = vmatprep.subr.bf16.mxu0 0
        %723 = vmatpush1.bf16.msra.mxu0 %v585
        %724 = vmatprep.subr.bf16.mxu0 0
        %725 = vmatpush1.bf16.msra.mxu0 %v584
        %726 = vmatprep.subr.bf16.mxu0 0
        %727 = vmatpush1.bf16.msra.mxu0 %v583
        %728 = vmatprep.subr.bf16.mxu0 0
        %729 = vmatpush2.bf16.msra.mxu0 0
        %730 = vmatprep.subr.bf16.mxu0 0
        %731 = vmatpush2.bf16.msra.mxu0 0
        %732 = vmatprep.subr.bf16.mxu0 0
        %733 = vmatpush2.bf16.msra.mxu0 0
        %734 = vmatprep.subr.bf16.mxu0 0
        %735 = vmatpush2.bf16.msra.mxu0 0
        %736 = vmatprep.subr.bf16.mxu0 0
        %737 = vmatpush2.bf16.msra.mxu0 0
        %738 = vmatprep.subr.bf16.mxu0 0
        %739 = vmatpush2.bf16.msra.mxu0 0
        %740 = vmatprep.subr.bf16.mxu0 0
        %741 = vmatpush2.bf16.msra.mxu0 0
        %742 = vmatprep.subr.bf16.mxu0 0
        %743 = vmatpush2.bf16.msra.mxu0 0
        %744 = vmatprep.mubr.bf16.mxu0 0
        %745 = vmatmul.mubr.bf16.gmra.mxu0 %v393
        %v746 = vpop.f32.mrf.mxu0
        %v747 = vadd.f32 %v650, %v746
        %v748 = vpop.f32.mrf.mxu0
        %v749 = vpop.f32.mrf.mxu0
        %v750 = vadd.f32 %v653, %v749
        %v751 = vpop.f32.mrf.mxu0
        %752 = vmatprep.mubr.bf16.mxu0 0
        %753 = vmatmul.mubr.bf16.gmra.mxu0 %v396
        %v754 = vpop.f32.mrf.mxu0
        %v755 = vadd.f32 %v658, %v754
        %v756 = vpop.f32.mrf.mxu0
        %v757 = vpop.f32.mrf.mxu0
        %v758 = vadd.f32 %v661, %v757
        %v759 = vpop.f32.mrf.mxu0
        %760 = vmatprep.mubr.bf16.mxu0 0
        %761 = vmatmul.mubr.bf16.gmra.mxu0 %v399
        %v762 = vpop.f32.mrf.mxu0
        %v763 = vadd.f32 %v666, %v762
        %v764 = vpop.f32.mrf.mxu0
        %v765 = vpop.f32.mrf.mxu0
        %v766 = vadd.f32 %v669, %v765
        %v767 = vpop.f32.mrf.mxu0
        %768 = vmatprep.mubr.bf16.mxu0 0
        %769 = vmatmul.mubr.bf16.gmra.mxu0 %v402
        %v770 = vpop.f32.mrf.mxu0
        %v771 = vadd.f32 %v674, %v770
        %v772 = vpop.f32.mrf.mxu0
        %v773 = vpop.f32.mrf.mxu0
        %v774 = vadd.f32 %v677, %v773
        %v775 = vpop.f32.mrf.mxu0
        %776 = vmatprep.mubr.bf16.mxu0 0
        %777 = vmatmul.mubr.bf16.gmra.mxu0 %v405
        %v778 = vpop.f32.mrf.mxu0
        %v779 = vadd.f32 %v682, %v778
        %v780 = vpop.f32.mrf.mxu0
        %v781 = vpop.f32.mrf.mxu0
        %v782 = vadd.f32 %v685, %v781
        %v783 = vpop.f32.mrf.mxu0
        %784 = vmatprep.mubr.bf16.mxu0 0
        %785 = vmatmul.mubr.bf16.gmra.mxu0 %v408
        %v786 = vpop.f32.mrf.mxu0
        %v787 = vadd.f32 %v690, %v786
        %v788 = vpop.f32.mrf.mxu0
        %v789 = vpop.f32.mrf.mxu0
        %v790 = vadd.f32 %v693, %v789
        %v791 = vpop.f32.mrf.mxu0
        %792 = vmatprep.mubr.bf16.mxu0 0
        %793 = vmatmul.mubr.bf16.gmra.mxu0 %v411
        %v794 = vpop.f32.mrf.mxu0
        %v795 = vadd.f32 %v698, %v794
        %v796 = vpop.f32.mrf.mxu0
        %v797 = vpop.f32.mrf.mxu0
        %v798 = vadd.f32 %v701, %v797
        %v799 = vpop.f32.mrf.mxu0
        %800 = vmatprep.mubr.bf16.mxu0 0
        %801 = vmatmul.mubr.bf16.gmra.mxu0 %v414
        %v802 = vpop.f32.mrf.mxu0
        %v803 = vadd.f32 %v706, %v802
        %v804 = vpop.f32.mrf.mxu0
        %v805 = vpop.f32.mrf.mxu0
        %v806 = vadd.f32 %v709, %v805
        %v807 = vpop.f32.mrf.mxu0
        %808 = vdwg.mxu0
        %809 = vst [vmem:[#allocation2] sm:$0xff] %v747
        %810 = vst [vmem:[#allocation2 + $0x8] sm:$0xff] %v750
        %811 = vst [vmem:[#allocation2 + $0x10] sm:$0xff] %v755
        %812 = vst [vmem:[#allocation2 + $0x18] sm:$0xff] %v758
        %813 = vst [vmem:[#allocation2 + $0x20] sm:$0xff] %v763
        %814 = vst [vmem:[#allocation2 + $0x28] sm:$0xff] %v766
        %815 = vst [vmem:[#allocation2 + $0x30] sm:$0xff] %v771
        %816 = vst [vmem:[#allocation2 + $0x38] sm:$0xff] %v774
        %817 = vst [vmem:[#allocation2 + $0x40] sm:$0xff] %v779
        %818 = vst [vmem:[#allocation2 + $0x48] sm:$0xff] %v782
        %819 = vst [vmem:[#allocation2 + $0x50] sm:$0xff] %v787
        %820 = vst [vmem:[#allocation2 + $0x58] sm:$0xff] %v790
        %821 = vst [vmem:[#allocation2 + $0x60] sm:$0xff] %v795
        %822 = vst [vmem:[#allocation2 + $0x68] sm:$0xff] %v798
        %823 = vst [vmem:[#allocation2 + $0x70] sm:$0xff] %v803
        %824 = vst [vmem:[#allocation2 + $0x78] sm:$0xff] %v806
        %s825 = sadd.s32 %s185, 1
        %s826 = smul.u32 %s825, 3
        %s827 = smul.addr %s826, 4
        %s828 = scalar_lea.vmem %s182, %s827
        %v829 = vld [vmem:[%s828] sm:$0xf]
        %v830 = vld [vmem:[%s828 + $0x4] sm:$0xf]
        %v831 = vld [vmem:[%s828 + $0x8] sm:$0x1]
        %v832 = vld [vmem:[%s828 + $0xc] sm:$0xf]
        %v833 = vld [vmem:[%s828 + $0x10] sm:$0xf]
        %v834 = vld [vmem:[%s828 + $0x14] sm:$0x1]
        %v835 = vld [vmem:[%s828 + $0x18] sm:$0xf]
        %v836 = vld [vmem:[%s828 + $0x1c] sm:$0xf]
        %v837 = vld [vmem:[%s828 + $0x20] sm:$0x1]
        %v838 = vld [vmem:[%s828 + $0x24] sm:$0xf]
        %v839 = vld [vmem:[%s828 + $0x28] sm:$0xf]
        %v840 = vld [vmem:[%s828 + $0x2c] sm:$0x1]
        %v841 = vld [vmem:[%s828 + $0x30] sm:$0xf]
        %v842 = vld [vmem:[%s828 + $0x34] sm:$0xf]
        %v843 = vld [vmem:[%s828 + $0x38] sm:$0x1]
        %v844 = vld [vmem:[%s828 + $0x3c] sm:$0xf]
        %v845 = vld [vmem:[%s828 + $0x40] sm:$0xf]
        %v846 = vld [vmem:[%s828 + $0x44] sm:$0x1]
        %v847 = vld [vmem:[%s828 + $0x48] sm:$0xf]
        %v848 = vld [vmem:[%s828 + $0x4c] sm:$0xf]
        %v849 = vld [vmem:[%s828 + $0x50] sm:$0x1]
        %v850 = vld [vmem:[%s828 + $0x54] sm:$0xf]
        %v851 = vld [vmem:[%s828 + $0x58] sm:$0xf]
        %v852 = vld [vmem:[%s828 + $0x5c] sm:$0x1]
        %v869 = vunpack.c.l.b16 %v829
        %v870 = vunpack.c.l.b16 %v830
        %v871 = vunpack.c.l.b16 %v832
        %v872 = vunpack.c.l.b16 %v833
        %v873 = vunpack.c.l.b16 %v835
        %v874 = vunpack.c.l.b16 %v836
        %v875 = vunpack.c.l.b16 %v838
        %v876 = vunpack.c.l.b16 %v839
        %v877 = vunpack.c.l.b16 %v841
        %v878 = vunpack.c.l.b16 %v842
        %v879 = vunpack.c.l.b16 %v844
        %v880 = vunpack.c.l.b16 %v845
        %v881 = vunpack.c.l.b16 %v847
        %v882 = vunpack.c.l.b16 %v848
        %v883 = vunpack.c.l.b16 %v850
        %v884 = vunpack.c.l.b16 %v851
        %v885 = vpack.c.b16 %v870, %v869
        %v886 = vpack.c.b16 %v872, %v871
        %v887 = vpack.c.b16 %v874, %v873
        %v888 = vpack.c.b16 %v876, %v875
        %v889 = vpack.c.b16 %v878, %v877
        %v890 = vpack.c.b16 %v880, %v879
        %v891 = vpack.c.b16 %v882, %v881
        %v892 = vpack.c.b16 %v884, %v883
        %v909 = vunpack.c.l.b16 %v831
        %v910 = vunpack.c.l.b16 %v834
        %v911 = vunpack.c.l.b16 %v837
        %v912 = vunpack.c.l.b16 %v840
        %v913 = vunpack.c.l.b16 %v843
        %v914 = vunpack.c.l.b16 %v846
        %v915 = vunpack.c.l.b16 %v849
        %v916 = vunpack.c.l.b16 %v852
        %v917 = vpack.c.b16 %v909, %v909
        %v918 = vpack.c.b16 %v910, %v910
        %v919 = vpack.c.b16 %v911, %v911
        %v920 = vpack.c.b16 %v912, %v912
        %v921 = vpack.c.b16 %v913, %v913
        %v922 = vpack.c.b16 %v914, %v914
        %v923 = vpack.c.b16 %v915, %v915
        %v924 = vpack.c.b16 %v916, %v916
        %v926 = vshrl.u32 %v885, 16
        %v928 = vshll.u32 %v885, 16
        %v930 = vrot.slane %v928, 1
        %v931 = vor.u32 %v926, %v930
        %v933 = vshll.u32 %v917, 16
        %v935 = vrot.slane %v933, 1
        %v936 = vsel %vm285, %v931, %v935
        %v938 = vshrl.u32 %v886, 16
        %v940 = vshll.u32 %v886, 16
        %v942 = vrot.slane %v940, 1
        %v943 = vor.u32 %v938, %v942
        %v945 = vshll.u32 %v918, 16
        %v947 = vrot.slane %v945, 1
        %v948 = vsel %vm285, %v943, %v947
        %v950 = vshrl.u32 %v887, 16
        %v952 = vshll.u32 %v887, 16
        %v954 = vrot.slane %v952, 1
        %v955 = vor.u32 %v950, %v954
        %v957 = vshll.u32 %v919, 16
        %v959 = vrot.slane %v957, 1
        %v960 = vsel %vm285, %v955, %v959
        %v962 = vshrl.u32 %v888, 16
        %v964 = vshll.u32 %v888, 16
        %v966 = vrot.slane %v964, 1
        %v967 = vor.u32 %v962, %v966
        %v969 = vshll.u32 %v920, 16
        %v971 = vrot.slane %v969, 1
        %v972 = vsel %vm285, %v967, %v971
        %v974 = vshrl.u32 %v889, 16
        %v976 = vshll.u32 %v889, 16
        %v978 = vrot.slane %v976, 1
        %v979 = vor.u32 %v974, %v978
        %v981 = vshll.u32 %v921, 16
        %v983 = vrot.slane %v981, 1
        %v984 = vsel %vm285, %v979, %v983
        %v986 = vshrl.u32 %v890, 16
        %v988 = vshll.u32 %v890, 16
        %v990 = vrot.slane %v988, 1
        %v991 = vor.u32 %v986, %v990
        %v993 = vshll.u32 %v922, 16
        %v995 = vrot.slane %v993, 1
        %v996 = vsel %vm285, %v991, %v995
        %v998 = vshrl.u32 %v891, 16
        %v1000 = vshll.u32 %v891, 16
        %v1002 = vrot.slane %v1000, 1
        %v1003 = vor.u32 %v998, %v1002
        %v1005 = vshll.u32 %v923, 16
        %v1007 = vrot.slane %v1005, 1
        %v1008 = vsel %vm285, %v1003, %v1007
        %v1010 = vshrl.u32 %v892, 16
        %v1012 = vshll.u32 %v892, 16
        %v1014 = vrot.slane %v1012, 1
        %v1015 = vor.u32 %v1010, %v1014
        %v1017 = vshll.u32 %v924, 16
        %v1019 = vrot.slane %v1017, 1
        %v1020 = vsel %vm285, %v1015, %v1019
        %v1029 = vrot.slane %v885, 1
        %v1030 = vrot.slane %v917, 1
        %v1031 = vsel %vm390, %v1029, %v1030
        %v1032 = vrot.slane %v886, 1
        %v1033 = vrot.slane %v918, 1
        %v1034 = vsel %vm390, %v1032, %v1033
        %v1035 = vrot.slane %v887, 1
        %v1036 = vrot.slane %v919, 1
        %v1037 = vsel %vm390, %v1035, %v1036
        %v1038 = vrot.slane %v888, 1
        %v1039 = vrot.slane %v920, 1
        %v1040 = vsel %vm390, %v1038, %v1039
        %v1041 = vrot.slane %v889, 1
        %v1042 = vrot.slane %v921, 1
        %v1043 = vsel %vm390, %v1041, %v1042
        %v1044 = vrot.slane %v890, 1
        %v1045 = vrot.slane %v922, 1
        %v1046 = vsel %vm390, %v1044, %v1045
        %v1047 = vrot.slane %v891, 1
        %v1048 = vrot.slane %v923, 1
        %v1049 = vsel %vm390, %v1047, %v1048
        %v1050 = vrot.slane %v892, 1
        %v1051 = vrot.slane %v924, 1
        %v1052 = vsel %vm390, %v1050, %v1051
        %s1061 = scalar_lea.vmem %s1, 192
        %v1062 = vld [vmem:[%s1061] sm:$0xf]
        %v1063 = vld [vmem:[%s1061 + $0x4] sm:$0xf]
        %v1064 = vld [vmem:[%s1061 + $0x8] sm:$0xf]
        %v1065 = vld [vmem:[%s1061 + $0xc] sm:$0xf]
        %v1066 = vld [vmem:[%s1061 + $0x10] sm:$0xf]
        %v1067 = vld [vmem:[%s1061 + $0x14] sm:$0xf]
        %v1068 = vld [vmem:[%s1061 + $0x18] sm:$0xf]
        %v1069 = vld [vmem:[%s1061 + $0x1c] sm:$0xf]
        %v1070 = vld [vmem:[%s1061 + $0x20] sm:$0xf]
        %v1071 = vld [vmem:[%s1061 + $0x24] sm:$0xf]
        %v1072 = vld [vmem:[%s1061 + $0x28] sm:$0xf]
        %v1073 = vld [vmem:[%s1061 + $0x2c] sm:$0xf]
        %v1074 = vld [vmem:[%s1061 + $0x30] sm:$0xf]
        %v1075 = vld [vmem:[%s1061 + $0x34] sm:$0xf]
        %v1076 = vld [vmem:[%s1061 + $0x38] sm:$0xf]
        %v1077 = vld [vmem:[%s1061 + $0x3c] sm:$0xf]
        %v1078 = vld [vmem:[%s1061 + $0x40] sm:$0xf]
        %v1079 = vld [vmem:[%s1061 + $0x44] sm:$0xf]
        %v1080 = vld [vmem:[%s1061 + $0x48] sm:$0xf]
        %v1081 = vld [vmem:[%s1061 + $0x4c] sm:$0xf]
        %v1082 = vld [vmem:[%s1061 + $0x50] sm:$0xf]
        %v1083 = vld [vmem:[%s1061 + $0x54] sm:$0xf]
        %v1084 = vld [vmem:[%s1061 + $0x58] sm:$0xf]
        %v1085 = vld [vmem:[%s1061 + $0x5c] sm:$0xf]
        %v1086 = vld [vmem:[%s1061 + $0x60] sm:$0xf]
        %v1087 = vld [vmem:[%s1061 + $0x64] sm:$0xf]
        %v1088 = vld [vmem:[%s1061 + $0x68] sm:$0xf]
        %v1089 = vld [vmem:[%s1061 + $0x6c] sm:$0xf]
        %v1090 = vld [vmem:[%s1061 + $0x70] sm:$0xf]
        %v1091 = vld [vmem:[%s1061 + $0x74] sm:$0xf]
        %v1092 = vld [vmem:[%s1061 + $0x78] sm:$0xf]
        %v1093 = vld [vmem:[%s1061 + $0x7c] sm:$0xf]
        %v1094 = vld [vmem:[%s1061 + $0x80] sm:$0xf]
        %v1095 = vld [vmem:[%s1061 + $0x84] sm:$0xf]
        %v1096 = vld [vmem:[%s1061 + $0x88] sm:$0xf]
        %v1097 = vld [vmem:[%s1061 + $0x8c] sm:$0xf]
        %v1098 = vld [vmem:[%s1061 + $0x90] sm:$0xf]
        %v1099 = vld [vmem:[%s1061 + $0x94] sm:$0xf]
        %v1100 = vld [vmem:[%s1061 + $0x98] sm:$0xf]
        %v1101 = vld [vmem:[%s1061 + $0x9c] sm:$0xf]
        %v1102 = vld [vmem:[%s1061 + $0xa0] sm:$0xf]
        %v1103 = vld [vmem:[%s1061 + $0xa4] sm:$0xf]
        %v1104 = vld [vmem:[%s1061 + $0xa8] sm:$0xf]
        %v1105 = vld [vmem:[%s1061 + $0xac] sm:$0xf]
        %v1106 = vld [vmem:[%s1061 + $0xb0] sm:$0xf]
        %v1107 = vld [vmem:[%s1061 + $0xb4] sm:$0xf]
        %v1108 = vld [vmem:[%s1061 + $0xb8] sm:$0xf]
        %v1109 = vld [vmem:[%s1061 + $0xbc] sm:$0xf]
        %v1158 = vunpack.c.l.b16 %v1062
        %v1159 = vunpack.c.l.b16 %v1063
        %v1160 = vunpack.c.l.b16 %v1064
        %v1161 = vunpack.c.l.b16 %v1065
        %v1162 = vunpack.c.l.b16 %v1066
        %v1163 = vunpack.c.l.b16 %v1067
        %v1164 = vunpack.c.l.b16 %v1068
        %v1165 = vunpack.c.l.b16 %v1069
        %v1166 = vunpack.c.l.b16 %v1070
        %v1167 = vunpack.c.l.b16 %v1071
        %v1168 = vunpack.c.l.b16 %v1072
        %v1169 = vunpack.c.l.b16 %v1073
        %v1170 = vunpack.c.l.b16 %v1074
        %v1171 = vunpack.c.l.b16 %v1075
        %v1172 = vunpack.c.l.b16 %v1076
        %v1173 = vunpack.c.l.b16 %v1077
        %v1174 = vunpack.c.l.b16 %v1078
        %v1175 = vunpack.c.l.b16 %v1079
        %v1176 = vunpack.c.l.b16 %v1080
        %v1177 = vunpack.c.l.b16 %v1081
        %v1178 = vunpack.c.l.b16 %v1082
        %v1179 = vunpack.c.l.b16 %v1083
        %v1180 = vunpack.c.l.b16 %v1084
        %v1181 = vunpack.c.l.b16 %v1085
        %v1182 = vunpack.c.l.b16 %v1086
        %v1183 = vunpack.c.l.b16 %v1087
        %v1184 = vunpack.c.l.b16 %v1088
        %v1185 = vunpack.c.l.b16 %v1089
        %v1186 = vunpack.c.l.b16 %v1090
        %v1187 = vunpack.c.l.b16 %v1091
        %v1188 = vunpack.c.l.b16 %v1092
        %v1189 = vunpack.c.l.b16 %v1093
        %v1190 = vunpack.c.l.b16 %v1094
        %v1191 = vunpack.c.l.b16 %v1095
        %v1192 = vunpack.c.l.b16 %v1096
        %v1193 = vunpack.c.l.b16 %v1097
        %v1194 = vunpack.c.l.b16 %v1098
        %v1195 = vunpack.c.l.b16 %v1099
        %v1196 = vunpack.c.l.b16 %v1100
        %v1197 = vunpack.c.l.b16 %v1101
        %v1198 = vunpack.c.l.b16 %v1102
        %v1199 = vunpack.c.l.b16 %v1103
        %v1200 = vunpack.c.l.b16 %v1104
        %v1201 = vunpack.c.l.b16 %v1105
        %v1202 = vunpack.c.l.b16 %v1106
        %v1203 = vunpack.c.l.b16 %v1107
        %v1204 = vunpack.c.l.b16 %v1108
        %v1205 = vunpack.c.l.b16 %v1109
        %v1206 = vpack.c.b16 %v1159, %v1158
        %v1207 = vpack.c.b16 %v1161, %v1160
        %v1208 = vpack.c.b16 %v1163, %v1162
        %v1209 = vpack.c.b16 %v1165, %v1164
        %v1210 = vpack.c.b16 %v1167, %v1166
        %v1211 = vpack.c.b16 %v1169, %v1168
        %v1212 = vpack.c.b16 %v1171, %v1170
        %v1213 = vpack.c.b16 %v1173, %v1172
        %v1214 = vpack.c.b16 %v1175, %v1174
        %v1215 = vpack.c.b16 %v1177, %v1176
        %v1216 = vpack.c.b16 %v1179, %v1178
        %v1217 = vpack.c.b16 %v1181, %v1180
        %v1218 = vpack.c.b16 %v1183, %v1182
        %v1219 = vpack.c.b16 %v1185, %v1184
        %v1220 = vpack.c.b16 %v1187, %v1186
        %v1221 = vpack.c.b16 %v1189, %v1188
        %v1222 = vpack.c.b16 %v1191, %v1190
        %v1223 = vpack.c.b16 %v1193, %v1192
        %v1224 = vpack.c.b16 %v1195, %v1194
        %v1225 = vpack.c.b16 %v1197, %v1196
        %v1226 = vpack.c.b16 %v1199, %v1198
        %v1227 = vpack.c.b16 %v1201, %v1200
        %v1228 = vpack.c.b16 %v1203, %v1202
        %v1229 = vpack.c.b16 %v1205, %v1204
        %1254 = vmatprep.subr.bf16.mxu0 0
        %1255 = vmatpush1.bf16.msra.mxu0 %v1213
        %1256 = vmatprep.subr.bf16.mxu0 0
        %1257 = vmatpush1.bf16.msra.mxu0 %v1212
        %1258 = vmatprep.subr.bf16.mxu0 0
        %1259 = vmatpush1.bf16.msra.mxu0 %v1211
        %1260 = vmatprep.subr.bf16.mxu0 0
        %1261 = vmatpush1.bf16.msra.mxu0 %v1210
        %1262 = vmatprep.subr.bf16.mxu0 0
        %1263 = vmatpush1.bf16.msra.mxu0 %v1209
        %1264 = vmatprep.subr.bf16.mxu0 0
        %1265 = vmatpush1.bf16.msra.mxu0 %v1208
        %1266 = vmatprep.subr.bf16.mxu0 0
        %1267 = vmatpush1.bf16.msra.mxu0 %v1207
        %1268 = vmatprep.subr.bf16.mxu0 0
        %1269 = vmatpush1.bf16.msra.mxu0 %v1206
        %1270 = vmatprep.subr.bf16.mxu0 0
        %1271 = vmatpush2.bf16.msra.mxu0 %v1221
        %1272 = vmatprep.subr.bf16.mxu0 0
        %1273 = vmatpush2.bf16.msra.mxu0 %v1220
        %1274 = vmatprep.subr.bf16.mxu0 0
        %1275 = vmatpush2.bf16.msra.mxu0 %v1219
        %1276 = vmatprep.subr.bf16.mxu0 0
        %1277 = vmatpush2.bf16.msra.mxu0 %v1218
        %1278 = vmatprep.subr.bf16.mxu0 0
        %1279 = vmatpush2.bf16.msra.mxu0 %v1217
        %1280 = vmatprep.subr.bf16.mxu0 0
        %1281 = vmatpush2.bf16.msra.mxu0 %v1216
        %1282 = vmatprep.subr.bf16.mxu0 0
        %1283 = vmatpush2.bf16.msra.mxu0 %v1215
        %1284 = vmatprep.subr.bf16.mxu0 0
        %1285 = vmatpush2.bf16.msra.mxu0 %v1214
        %1286 = vmatprep.mubr.bf16.mxu0 %v936
        %1287 = vmatmul.mubr.bf16.gmra.mxu0 %v885
        %v1288 = vpop.f32.mrf.mxu0
        %v1289 = vadd.f32 0.0, %v1288
        %v1290 = vpop.f32.mrf.mxu0
        %v1291 = vpop.f32.mrf.mxu0
        %v1292 = vadd.f32 0.0, %v1291
        %v1293 = vpop.f32.mrf.mxu0
        %1294 = vmatprep.mubr.bf16.mxu0 %v948
        %1295 = vmatmul.mubr.bf16.gmra.mxu0 %v886
        %v1296 = vpop.f32.mrf.mxu0
        %v1297 = vadd.f32 0.0, %v1296
        %v1298 = vpop.f32.mrf.mxu0
        %v1299 = vpop.f32.mrf.mxu0
        %v1300 = vadd.f32 0.0, %v1299
        %v1301 = vpop.f32.mrf.mxu0
        %1302 = vmatprep.mubr.bf16.mxu0 %v960
        %1303 = vmatmul.mubr.bf16.gmra.mxu0 %v887
        %v1304 = vpop.f32.mrf.mxu0
        %v1305 = vadd.f32 0.0, %v1304
        %v1306 = vpop.f32.mrf.mxu0
        %v1307 = vpop.f32.mrf.mxu0
        %v1308 = vadd.f32 0.0, %v1307
        %v1309 = vpop.f32.mrf.mxu0
        %1310 = vmatprep.mubr.bf16.mxu0 %v972
        %1311 = vmatmul.mubr.bf16.gmra.mxu0 %v888
        %v1312 = vpop.f32.mrf.mxu0
        %v1313 = vadd.f32 0.0, %v1312
        %v1314 = vpop.f32.mrf.mxu0
        %v1315 = vpop.f32.mrf.mxu0
        %v1316 = vadd.f32 0.0, %v1315
        %v1317 = vpop.f32.mrf.mxu0
        %1318 = vmatprep.mubr.bf16.mxu0 %v984
        %1319 = vmatmul.mubr.bf16.gmra.mxu0 %v889
        %v1320 = vpop.f32.mrf.mxu0
        %v1321 = vadd.f32 0.0, %v1320
        %v1322 = vpop.f32.mrf.mxu0
        %v1323 = vpop.f32.mrf.mxu0
        %v1324 = vadd.f32 0.0, %v1323
        %v1325 = vpop.f32.mrf.mxu0
        %1326 = vmatprep.mubr.bf16.mxu0 %v996
        %1327 = vmatmul.mubr.bf16.gmra.mxu0 %v890
        %v1328 = vpop.f32.mrf.mxu0
        %v1329 = vadd.f32 0.0, %v1328
        %v1330 = vpop.f32.mrf.mxu0
        %v1331 = vpop.f32.mrf.mxu0
        %v1332 = vadd.f32 0.0, %v1331
        %v1333 = vpop.f32.mrf.mxu0
        %1334 = vmatprep.mubr.bf16.mxu0 %v1008
        %1335 = vmatmul.mubr.bf16.gmra.mxu0 %v891
        %v1336 = vpop.f32.mrf.mxu0
        %v1337 = vadd.f32 0.0, %v1336
        %v1338 = vpop.f32.mrf.mxu0
        %v1339 = vpop.f32.mrf.mxu0
        %v1340 = vadd.f32 0.0, %v1339
        %v1341 = vpop.f32.mrf.mxu0
        %1342 = vmatprep.mubr.bf16.mxu0 %v1020
        %1343 = vmatmul.mubr.bf16.gmra.mxu0 %v892
        %v1344 = vpop.f32.mrf.mxu0
        %v1345 = vadd.f32 0.0, %v1344
        %v1346 = vpop.f32.mrf.mxu0
        %v1347 = vpop.f32.mrf.mxu0
        %v1348 = vadd.f32 0.0, %v1347
        %v1349 = vpop.f32.mrf.mxu0
        %1350 = vdwg.mxu0
        %1351 = vmatprep.subr.bf16.mxu0 0
        %1352 = vmatpush1.bf16.msra.mxu0 %v1229
        %1353 = vmatprep.subr.bf16.mxu0 0
        %1354 = vmatpush1.bf16.msra.mxu0 %v1228
        %1355 = vmatprep.subr.bf16.mxu0 0
        %1356 = vmatpush1.bf16.msra.mxu0 %v1227
        %1357 = vmatprep.subr.bf16.mxu0 0
        %1358 = vmatpush1.bf16.msra.mxu0 %v1226
        %1359 = vmatprep.subr.bf16.mxu0 0
        %1360 = vmatpush1.bf16.msra.mxu0 %v1225
        %1361 = vmatprep.subr.bf16.mxu0 0
        %1362 = vmatpush1.bf16.msra.mxu0 %v1224
        %1363 = vmatprep.subr.bf16.mxu0 0
        %1364 = vmatpush1.bf16.msra.mxu0 %v1223
        %1365 = vmatprep.subr.bf16.mxu0 0
        %1366 = vmatpush1.bf16.msra.mxu0 %v1222
        %1367 = vmatprep.subr.bf16.mxu0 0
        %1368 = vmatpush2.bf16.msra.mxu0 0
        %1369 = vmatprep.subr.bf16.mxu0 0
        %1370 = vmatpush2.bf16.msra.mxu0 0
        %1371 = vmatprep.subr.bf16.mxu0 0
        %1372 = vmatpush2.bf16.msra.mxu0 0
        %1373 = vmatprep.subr.bf16.mxu0 0
        %1374 = vmatpush2.bf16.msra.mxu0 0
        %1375 = vmatprep.subr.bf16.mxu0 0
        %1376 = vmatpush2.bf16.msra.mxu0 0
        %1377 = vmatprep.subr.bf16.mxu0 0
        %1378 = vmatpush2.bf16.msra.mxu0 0
        %1379 = vmatprep.subr.bf16.mxu0 0
        %1380 = vmatpush2.bf16.msra.mxu0 0
        %1381 = vmatprep.subr.bf16.mxu0 0
        %1382 = vmatpush2.bf16.msra.mxu0 0
        %1383 = vmatprep.mubr.bf16.mxu0 0
        %1384 = vmatmul.mubr.bf16.gmra.mxu0 %v1031
        %v1385 = vpop.f32.mrf.mxu0
        %v1386 = vadd.f32 %v1289, %v1385
        %v1387 = vpop.f32.mrf.mxu0
        %v1388 = vpop.f32.mrf.mxu0
        %v1389 = vadd.f32 %v1292, %v1388
        %v1390 = vpop.f32.mrf.mxu0
        %1391 = vmatprep.mubr.bf16.mxu0 0
        %1392 = vmatmul.mubr.bf16.gmra.mxu0 %v1034
        %v1393 = vpop.f32.mrf.mxu0
        %v1394 = vadd.f32 %v1297, %v1393
        %v1395 = vpop.f32.mrf.mxu0
        %v1396 = vpop.f32.mrf.mxu0
        %v1397 = vadd.f32 %v1300, %v1396
        %v1398 = vpop.f32.mrf.mxu0
        %1399 = vmatprep.mubr.bf16.mxu0 0
        %1400 = vmatmul.mubr.bf16.gmra.mxu0 %v1037
        %v1401 = vpop.f32.mrf.mxu0
        %v1402 = vadd.f32 %v1305, %v1401
        %v1403 = vpop.f32.mrf.mxu0
        %v1404 = vpop.f32.mrf.mxu0
        %v1405 = vadd.f32 %v1308, %v1404
        %v1406 = vpop.f32.mrf.mxu0
        %1407 = vmatprep.mubr.bf16.mxu0 0
        %1408 = vmatmul.mubr.bf16.gmra.mxu0 %v1040
        %v1409 = vpop.f32.mrf.mxu0
        %v1410 = vadd.f32 %v1313, %v1409
        %v1411 = vpop.f32.mrf.mxu0
        %v1412 = vpop.f32.mrf.mxu0
        %v1413 = vadd.f32 %v1316, %v1412
        %v1414 = vpop.f32.mrf.mxu0
        %1415 = vmatprep.mubr.bf16.mxu0 0
        %1416 = vmatmul.mubr.bf16.gmra.mxu0 %v1043
        %v1417 = vpop.f32.mrf.mxu0
        %v1418 = vadd.f32 %v1321, %v1417
        %v1419 = vpop.f32.mrf.mxu0
        %v1420 = vpop.f32.mrf.mxu0
        %v1421 = vadd.f32 %v1324, %v1420
        %v1422 = vpop.f32.mrf.mxu0
        %1423 = vmatprep.mubr.bf16.mxu0 0
        %1424 = vmatmul.mubr.bf16.gmra.mxu0 %v1046
        %v1425 = vpop.f32.mrf.mxu0
        %v1426 = vadd.f32 %v1329, %v1425
        %v1427 = vpop.f32.mrf.mxu0
        %v1428 = vpop.f32.mrf.mxu0
        %v1429 = vadd.f32 %v1332, %v1428
        %v1430 = vpop.f32.mrf.mxu0
        %1431 = vmatprep.mubr.bf16.mxu0 0
        %1432 = vmatmul.mubr.bf16.gmra.mxu0 %v1049
        %v1433 = vpop.f32.mrf.mxu0
        %v1434 = vadd.f32 %v1337, %v1433
        %v1435 = vpop.f32.mrf.mxu0
        %v1436 = vpop.f32.mrf.mxu0
        %v1437 = vadd.f32 %v1340, %v1436
        %v1438 = vpop.f32.mrf.mxu0
        %1439 = vmatprep.mubr.bf16.mxu0 0
        %1440 = vmatmul.mubr.bf16.gmra.mxu0 %v1052
        %v1441 = vpop.f32.mrf.mxu0
        %v1442 = vadd.f32 %v1345, %v1441
        %v1443 = vpop.f32.mrf.mxu0
        %v1444 = vpop.f32.mrf.mxu0
        %v1445 = vadd.f32 %v1348, %v1444
        %v1446 = vpop.f32.mrf.mxu0
        %1447 = vdwg.mxu0
        %v1448 = vld [vmem:[#allocation2] sm:$0xff]
        %v1449 = vld [vmem:[#allocation2 + $0x8] sm:$0xff]
        %v1450 = vld [vmem:[#allocation2 + $0x10] sm:$0xff]
        %v1451 = vld [vmem:[#allocation2 + $0x18] sm:$0xff]
        %v1452 = vld [vmem:[#allocation2 + $0x20] sm:$0xff]
        %v1453 = vld [vmem:[#allocation2 + $0x28] sm:$0xff]
        %v1454 = vld [vmem:[#allocation2 + $0x30] sm:$0xff]
        %v1455 = vld [vmem:[#allocation2 + $0x38] sm:$0xff]
        %v1456 = vld [vmem:[#allocation2 + $0x40] sm:$0xff]
        %v1457 = vld [vmem:[#allocation2 + $0x48] sm:$0xff]
        %v1458 = vld [vmem:[#allocation2 + $0x50] sm:$0xff]
        %v1459 = vld [vmem:[#allocation2 + $0x58] sm:$0xff]
        %v1460 = vld [vmem:[#allocation2 + $0x60] sm:$0xff]
        %v1461 = vld [vmem:[#allocation2 + $0x68] sm:$0xff]
        %v1462 = vld [vmem:[#allocation2 + $0x70] sm:$0xff]
        %v1463 = vld [vmem:[#allocation2 + $0x78] sm:$0xff]
        %v1464 = vadd.f32 %v1448, %v1386
        %v1465 = vadd.f32 %v1449, %v1389
        %v1466 = vadd.f32 %v1450, %v1394
        %v1467 = vadd.f32 %v1451, %v1397
        %v1468 = vadd.f32 %v1452, %v1402
        %v1469 = vadd.f32 %v1453, %v1405
        %v1470 = vadd.f32 %v1454, %v1410
        %v1471 = vadd.f32 %v1455, %v1413
        %v1472 = vadd.f32 %v1456, %v1418
        %v1473 = vadd.f32 %v1457, %v1421
        %v1474 = vadd.f32 %v1458, %v1426
        %v1475 = vadd.f32 %v1459, %v1429
        %v1476 = vadd.f32 %v1460, %v1434
        %v1477 = vadd.f32 %v1461, %v1437
        %v1478 = vadd.f32 %v1462, %v1442
        %v1479 = vadd.f32 %v1463, %v1445
        %1480 = vst [vmem:[#allocation2] sm:$0xff] %v1464
        %1481 = vst [vmem:[#allocation2 + $0x8] sm:$0xff] %v1465
        %1482 = vst [vmem:[#allocation2 + $0x10] sm:$0xff] %v1466
        %1483 = vst [vmem:[#allocation2 + $0x18] sm:$0xff] %v1467
        %1484 = vst [vmem:[#allocation2 + $0x20] sm:$0xff] %v1468
        %1485 = vst [vmem:[#allocation2 + $0x28] sm:$0xff] %v1469
        %1486 = vst [vmem:[#allocation2 + $0x30] sm:$0xff] %v1470
        %1487 = vst [vmem:[#allocation2 + $0x38] sm:$0xff] %v1471
        %1488 = vst [vmem:[#allocation2 + $0x40] sm:$0xff] %v1472
        %1489 = vst [vmem:[#allocation2 + $0x48] sm:$0xff] %v1473
        %1490 = vst [vmem:[#allocation2 + $0x50] sm:$0xff] %v1474
        %1491 = vst [vmem:[#allocation2 + $0x58] sm:$0xff] %v1475
        %1492 = vst [vmem:[#allocation2 + $0x60] sm:$0xff] %v1476
        %1493 = vst [vmem:[#allocation2 + $0x68] sm:$0xff] %v1477
        %1494 = vst [vmem:[#allocation2 + $0x70] sm:$0xff] %v1478
        %1495 = vst [vmem:[#allocation2 + $0x78] sm:$0xff] %v1479
        %s1496 = sadd.s32 %s185, 2
        %s1497 = smul.u32 %s1496, 3
        %s1498 = smul.addr %s1497, 4
        %s1499 = scalar_lea.vmem %s182, %s1498
        %v1500 = vld [vmem:[%s1499] sm:$0xf]
        %v1501 = vld [vmem:[%s1499 + $0x4] sm:$0xf]
        %v1502 = vld [vmem:[%s1499 + $0x8] sm:$0x1]
        %v1503 = vld [vmem:[%s1499 + $0xc] sm:$0xf]
        %v1504 = vld [vmem:[%s1499 + $0x10] sm:$0xf]
        %v1505 = vld [vmem:[%s1499 + $0x14] sm:$0x1]
        %v1506 = vld [vmem:[%s1499 + $0x18] sm:$0xf]
        %v1507 = vld [vmem:[%s1499 + $0x1c] sm:$0xf]
        %v1508 = vld [vmem:[%s1499 + $0x20] sm:$0x1]
        %v1509 = vld [vmem:[%s1499 + $0x24] sm:$0xf]
        %v1510 = vld [vmem:[%s1499 + $0x28] sm:$0xf]
        %v1511 = vld [vmem:[%s1499 + $0x2c] sm:$0x1]
        %v1512 = vld [vmem:[%s1499 + $0x30] sm:$0xf]
        %v1513 = vld [vmem:[%s1499 + $0x34] sm:$0xf]
        %v1514 = vld [vmem:[%s1499 + $0x38] sm:$0x1]
        %v1515 = vld [vmem:[%s1499 + $0x3c] sm:$0xf]
        %v1516 = vld [vmem:[%s1499 + $0x40] sm:$0xf]
        %v1517 = vld [vmem:[%s1499 + $0x44] sm:$0x1]
        %v1518 = vld [vmem:[%s1499 + $0x48] sm:$0xf]
        %v1519 = vld [vmem:[%s1499 + $0x4c] sm:$0xf]
        %v1520 = vld [vmem:[%s1499 + $0x50] sm:$0x1]
        %v1521 = vld [vmem:[%s1499 + $0x54] sm:$0xf]
        %v1522 = vld [vmem:[%s1499 + $0x58] sm:$0xf]
        %v1523 = vld [vmem:[%s1499 + $0x5c] sm:$0x1]
        %v1540 = vunpack.c.l.b16 %v1500
        %v1541 = vunpack.c.l.b16 %v1501
        %v1542 = vunpack.c.l.b16 %v1503
        %v1543 = vunpack.c.l.b16 %v1504
        %v1544 = vunpack.c.l.b16 %v1506
        %v1545 = vunpack.c.l.b16 %v1507
        %v1546 = vunpack.c.l.b16 %v1509
        %v1547 = vunpack.c.l.b16 %v1510
        %v1548 = vunpack.c.l.b16 %v1512
        %v1549 = vunpack.c.l.b16 %v1513
        %v1550 = vunpack.c.l.b16 %v1515
        %v1551 = vunpack.c.l.b16 %v1516
        %v1552 = vunpack.c.l.b16 %v1518
        %v1553 = vunpack.c.l.b16 %v1519
        %v1554 = vunpack.c.l.b16 %v1521
        %v1555 = vunpack.c.l.b16 %v1522
        %v1556 = vpack.c.b16 %v1541, %v1540
        %v1557 = vpack.c.b16 %v1543, %v1542
        %v1558 = vpack.c.b16 %v1545, %v1544
        %v1559 = vpack.c.b16 %v1547, %v1546
        %v1560 = vpack.c.b16 %v1549, %v1548
        %v1561 = vpack.c.b16 %v1551, %v1550
        %v1562 = vpack.c.b16 %v1553, %v1552
        %v1563 = vpack.c.b16 %v1555, %v1554
        %v1580 = vunpack.c.l.b16 %v1502
        %v1581 = vunpack.c.l.b16 %v1505
        %v1582 = vunpack.c.l.b16 %v1508
        %v1583 = vunpack.c.l.b16 %v1511
        %v1584 = vunpack.c.l.b16 %v1514
        %v1585 = vunpack.c.l.b16 %v1517
        %v1586 = vunpack.c.l.b16 %v1520
        %v1587 = vunpack.c.l.b16 %v1523
        %v1588 = vpack.c.b16 %v1580, %v1580
        %v1589 = vpack.c.b16 %v1581, %v1581
        %v1590 = vpack.c.b16 %v1582, %v1582
        %v1591 = vpack.c.b16 %v1583, %v1583
        %v1592 = vpack.c.b16 %v1584, %v1584
        %v1593 = vpack.c.b16 %v1585, %v1585
        %v1594 = vpack.c.b16 %v1586, %v1586
        %v1595 = vpack.c.b16 %v1587, %v1587
        %v1597 = vshrl.u32 %v1556, 16
        %v1599 = vshll.u32 %v1556, 16
        %v1601 = vrot.slane %v1599, 1
        %v1602 = vor.u32 %v1597, %v1601
        %v1604 = vshll.u32 %v1588, 16
        %v1606 = vrot.slane %v1604, 1
        %v1607 = vsel %vm285, %v1602, %v1606
        %v1609 = vshrl.u32 %v1557, 16
        %v1611 = vshll.u32 %v1557, 16
        %v1613 = vrot.slane %v1611, 1
        %v1614 = vor.u32 %v1609, %v1613
        %v1616 = vshll.u32 %v1589, 16
        %v1618 = vrot.slane %v1616, 1
        %v1619 = vsel %vm285, %v1614, %v1618
        %v1621 = vshrl.u32 %v1558, 16
        %v1623 = vshll.u32 %v1558, 16
        %v1625 = vrot.slane %v1623, 1
        %v1626 = vor.u32 %v1621, %v1625
        %v1628 = vshll.u32 %v1590, 16
        %v1630 = vrot.slane %v1628, 1
        %v1631 = vsel %vm285, %v1626, %v1630
        %v1633 = vshrl.u32 %v1559, 16
        %v1635 = vshll.u32 %v1559, 16
        %v1637 = vrot.slane %v1635, 1
        %v1638 = vor.u32 %v1633, %v1637
        %v1640 = vshll.u32 %v1591, 16
        %v1642 = vrot.slane %v1640, 1
        %v1643 = vsel %vm285, %v1638, %v1642
        %v1645 = vshrl.u32 %v1560, 16
        %v1647 = vshll.u32 %v1560, 16
        %v1649 = vrot.slane %v1647, 1
        %v1650 = vor.u32 %v1645, %v1649
        %v1652 = vshll.u32 %v1592, 16
        %v1654 = vrot.slane %v1652, 1
        %v1655 = vsel %vm285, %v1650, %v1654
        %v1657 = vshrl.u32 %v1561, 16
        %v1659 = vshll.u32 %v1561, 16
        %v1661 = vrot.slane %v1659, 1
        %v1662 = vor.u32 %v1657, %v1661
        %v1664 = vshll.u32 %v1593, 16
        %v1666 = vrot.slane %v1664, 1
        %v1667 = vsel %vm285, %v1662, %v1666
        %v1669 = vshrl.u32 %v1562, 16
        %v1671 = vshll.u32 %v1562, 16
        %v1673 = vrot.slane %v1671, 1
        %v1674 = vor.u32 %v1669, %v1673
        %v1676 = vshll.u32 %v1594, 16
        %v1678 = vrot.slane %v1676, 1
        %v1679 = vsel %vm285, %v1674, %v1678
        %v1681 = vshrl.u32 %v1563, 16
        %v1683 = vshll.u32 %v1563, 16
        %v1685 = vrot.slane %v1683, 1
        %v1686 = vor.u32 %v1681, %v1685
        %v1688 = vshll.u32 %v1595, 16
        %v1690 = vrot.slane %v1688, 1
        %v1691 = vsel %vm285, %v1686, %v1690
        %v1700 = vrot.slane %v1556, 1
        %v1701 = vrot.slane %v1588, 1
        %v1702 = vsel %vm390, %v1700, %v1701
        %v1703 = vrot.slane %v1557, 1
        %v1704 = vrot.slane %v1589, 1
        %v1705 = vsel %vm390, %v1703, %v1704
        %v1706 = vrot.slane %v1558, 1
        %v1707 = vrot.slane %v1590, 1
        %v1708 = vsel %vm390, %v1706, %v1707
        %v1709 = vrot.slane %v1559, 1
        %v1710 = vrot.slane %v1591, 1
        %v1711 = vsel %vm390, %v1709, %v1710
        %v1712 = vrot.slane %v1560, 1
        %v1713 = vrot.slane %v1592, 1
        %v1714 = vsel %vm390, %v1712, %v1713
        %v1715 = vrot.slane %v1561, 1
        %v1716 = vrot.slane %v1593, 1
        %v1717 = vsel %vm390, %v1715, %v1716
        %v1718 = vrot.slane %v1562, 1
        %v1719 = vrot.slane %v1594, 1
        %v1720 = vsel %vm390, %v1718, %v1719
        %v1721 = vrot.slane %v1563, 1
        %v1722 = vrot.slane %v1595, 1
        %v1723 = vsel %vm390, %v1721, %v1722
        %s1732 = scalar_lea.vmem %s1, 384
        %v1733 = vld [vmem:[%s1732] sm:$0xf]
        %v1734 = vld [vmem:[%s1732 + $0x4] sm:$0xf]
        %v1735 = vld [vmem:[%s1732 + $0x8] sm:$0xf]
        %v1736 = vld [vmem:[%s1732 + $0xc] sm:$0xf]
        %v1737 = vld [vmem:[%s1732 + $0x10] sm:$0xf]
        %v1738 = vld [vmem:[%s1732 + $0x14] sm:$0xf]
        %v1739 = vld [vmem:[%s1732 + $0x18] sm:$0xf]
        %v1740 = vld [vmem:[%s1732 + $0x1c] sm:$0xf]
        %v1741 = vld [vmem:[%s1732 + $0x20] sm:$0xf]
        %v1742 = vld [vmem:[%s1732 + $0x24] sm:$0xf]
        %v1743 = vld [vmem:[%s1732 + $0x28] sm:$0xf]
        %v1744 = vld [vmem:[%s1732 + $0x2c] sm:$0xf]
        %v1745 = vld [vmem:[%s1732 + $0x30] sm:$0xf]
        %v1746 = vld [vmem:[%s1732 + $0x34] sm:$0xf]
        %v1747 = vld [vmem:[%s1732 + $0x38] sm:$0xf]
        %v1748 = vld [vmem:[%s1732 + $0x3c] sm:$0xf]
        %v1749 = vld [vmem:[%s1732 + $0x40] sm:$0xf]
        %v1750 = vld [vmem:[%s1732 + $0x44] sm:$0xf]
        %v1751 = vld [vmem:[%s1732 + $0x48] sm:$0xf]
        %v1752 = vld [vmem:[%s1732 + $0x4c] sm:$0xf]
        %v1753 = vld [vmem:[%s1732 + $0x50] sm:$0xf]
        %v1754 = vld [vmem:[%s1732 + $0x54] sm:$0xf]
        %v1755 = vld [vmem:[%s1732 + $0x58] sm:$0xf]
        %v1756 = vld [vmem:[%s1732 + $0x5c] sm:$0xf]
        %v1757 = vld [vmem:[%s1732 + $0x60] sm:$0xf]
        %v1758 = vld [vmem:[%s1732 + $0x64] sm:$0xf]
        %v1759 = vld [vmem:[%s1732 + $0x68] sm:$0xf]
        %v1760 = vld [vmem:[%s1732 + $0x6c] sm:$0xf]
        %v1761 = vld [vmem:[%s1732 + $0x70] sm:$0xf]
        %v1762 = vld [vmem:[%s1732 + $0x74] sm:$0xf]
        %v1763 = vld [vmem:[%s1732 + $0x78] sm:$0xf]
        %v1764 = vld [vmem:[%s1732 + $0x7c] sm:$0xf]
        %v1765 = vld [vmem:[%s1732 + $0x80] sm:$0xf]
        %v1766 = vld [vmem:[%s1732 + $0x84] sm:$0xf]
        %v1767 = vld [vmem:[%s1732 + $0x88] sm:$0xf]
        %v1768 = vld [vmem:[%s1732 + $0x8c] sm:$0xf]
        %v1769 = vld [vmem:[%s1732 + $0x90] sm:$0xf]
        %v1770 = vld [vmem:[%s1732 + $0x94] sm:$0xf]
        %v1771 = vld [vmem:[%s1732 + $0x98] sm:$0xf]
        %v1772 = vld [vmem:[%s1732 + $0x9c] sm:$0xf]
        %v1773 = vld [vmem:[%s1732 + $0xa0] sm:$0xf]
        %v1774 = vld [vmem:[%s1732 + $0xa4] sm:$0xf]
        %v1775 = vld [vmem:[%s1732 + $0xa8] sm:$0xf]
        %v1776 = vld [vmem:[%s1732 + $0xac] sm:$0xf]
        %v1777 = vld [vmem:[%s1732 + $0xb0] sm:$0xf]
        %v1778 = vld [vmem:[%s1732 + $0xb4] sm:$0xf]
        %v1779 = vld [vmem:[%s1732 + $0xb8] sm:$0xf]
        %v1780 = vld [vmem:[%s1732 + $0xbc] sm:$0xf]
        %v1829 = vunpack.c.l.b16 %v1733
        %v1830 = vunpack.c.l.b16 %v1734
        %v1831 = vunpack.c.l.b16 %v1735
        %v1832 = vunpack.c.l.b16 %v1736
        %v1833 = vunpack.c.l.b16 %v1737
        %v1834 = vunpack.c.l.b16 %v1738
        %v1835 = vunpack.c.l.b16 %v1739
        %v1836 = vunpack.c.l.b16 %v1740
        %v1837 = vunpack.c.l.b16 %v1741
        %v1838 = vunpack.c.l.b16 %v1742
        %v1839 = vunpack.c.l.b16 %v1743
        %v1840 = vunpack.c.l.b16 %v1744
        %v1841 = vunpack.c.l.b16 %v1745
        %v1842 = vunpack.c.l.b16 %v1746
        %v1843 = vunpack.c.l.b16 %v1747
        %v1844 = vunpack.c.l.b16 %v1748
        %v1845 = vunpack.c.l.b16 %v1749
        %v1846 = vunpack.c.l.b16 %v1750
        %v1847 = vunpack.c.l.b16 %v1751
        %v1848 = vunpack.c.l.b16 %v1752
        %v1849 = vunpack.c.l.b16 %v1753
        %v1850 = vunpack.c.l.b16 %v1754
        %v1851 = vunpack.c.l.b16 %v1755
        %v1852 = vunpack.c.l.b16 %v1756
        %v1853 = vunpack.c.l.b16 %v1757
        %v1854 = vunpack.c.l.b16 %v1758
        %v1855 = vunpack.c.l.b16 %v1759
        %v1856 = vunpack.c.l.b16 %v1760
        %v1857 = vunpack.c.l.b16 %v1761
        %v1858 = vunpack.c.l.b16 %v1762
        %v1859 = vunpack.c.l.b16 %v1763
        %v1860 = vunpack.c.l.b16 %v1764
        %v1861 = vunpack.c.l.b16 %v1765
        %v1862 = vunpack.c.l.b16 %v1766
        %v1863 = vunpack.c.l.b16 %v1767
        %v1864 = vunpack.c.l.b16 %v1768
        %v1865 = vunpack.c.l.b16 %v1769
        %v1866 = vunpack.c.l.b16 %v1770
        %v1867 = vunpack.c.l.b16 %v1771
        %v1868 = vunpack.c.l.b16 %v1772
        %v1869 = vunpack.c.l.b16 %v1773
        %v1870 = vunpack.c.l.b16 %v1774
        %v1871 = vunpack.c.l.b16 %v1775
        %v1872 = vunpack.c.l.b16 %v1776
        %v1873 = vunpack.c.l.b16 %v1777
        %v1874 = vunpack.c.l.b16 %v1778
        %v1875 = vunpack.c.l.b16 %v1779
        %v1876 = vunpack.c.l.b16 %v1780
        %v1877 = vpack.c.b16 %v1830, %v1829
        %v1878 = vpack.c.b16 %v1832, %v1831
        %v1879 = vpack.c.b16 %v1834, %v1833
        %v1880 = vpack.c.b16 %v1836, %v1835
        %v1881 = vpack.c.b16 %v1838, %v1837
        %v1882 = vpack.c.b16 %v1840, %v1839
        %v1883 = vpack.c.b16 %v1842, %v1841
        %v1884 = vpack.c.b16 %v1844, %v1843
        %v1885 = vpack.c.b16 %v1846, %v1845
        %v1886 = vpack.c.b16 %v1848, %v1847
        %v1887 = vpack.c.b16 %v1850, %v1849
        %v1888 = vpack.c.b16 %v1852, %v1851
        %v1889 = vpack.c.b16 %v1854, %v1853
        %v1890 = vpack.c.b16 %v1856, %v1855
        %v1891 = vpack.c.b16 %v1858, %v1857
        %v1892 = vpack.c.b16 %v1860, %v1859
        %v1893 = vpack.c.b16 %v1862, %v1861
        %v1894 = vpack.c.b16 %v1864, %v1863
        %v1895 = vpack.c.b16 %v1866, %v1865
        %v1896 = vpack.c.b16 %v1868, %v1867
        %v1897 = vpack.c.b16 %v1870, %v1869
        %v1898 = vpack.c.b16 %v1872, %v1871
        %v1899 = vpack.c.b16 %v1874, %v1873
        %v1900 = vpack.c.b16 %v1876, %v1875
        %1925 = vmatprep.subr.bf16.mxu0 0
        %1926 = vmatpush1.bf16.msra.mxu0 %v1884
        %1927 = vmatprep.subr.bf16.mxu0 0
        %1928 = vmatpush1.bf16.msra.mxu0 %v1883
        %1929 = vmatprep.subr.bf16.mxu0 0
        %1930 = vmatpush1.bf16.msra.mxu0 %v1882
        %1931 = vmatprep.subr.bf16.mxu0 0
        %1932 = vmatpush1.bf16.msra.mxu0 %v1881
        %1933 = vmatprep.subr.bf16.mxu0 0
        %1934 = vmatpush1.bf16.msra.mxu0 %v1880
        %1935 = vmatprep.subr.bf16.mxu0 0
        %1936 = vmatpush1.bf16.msra.mxu0 %v1879
        %1937 = vmatprep.subr.bf16.mxu0 0
        %1938 = vmatpush1.bf16.msra.mxu0 %v1878
        %1939 = vmatprep.subr.bf16.mxu0 0
        %1940 = vmatpush1.bf16.msra.mxu0 %v1877
        %1941 = vmatprep.subr.bf16.mxu0 0
        %1942 = vmatpush2.bf16.msra.mxu0 %v1892
        %1943 = vmatprep.subr.bf16.mxu0 0
        %1944 = vmatpush2.bf16.msra.mxu0 %v1891
        %1945 = vmatprep.subr.bf16.mxu0 0
        %1946 = vmatpush2.bf16.msra.mxu0 %v1890
        %1947 = vmatprep.subr.bf16.mxu0 0
        %1948 = vmatpush2.bf16.msra.mxu0 %v1889
        %1949 = vmatprep.subr.bf16.mxu0 0
        %1950 = vmatpush2.bf16.msra.mxu0 %v1888
        %1951 = vmatprep.subr.bf16.mxu0 0
        %1952 = vmatpush2.bf16.msra.mxu0 %v1887
        %1953 = vmatprep.subr.bf16.mxu0 0
        %1954 = vmatpush2.bf16.msra.mxu0 %v1886
        %1955 = vmatprep.subr.bf16.mxu0 0
        %1956 = vmatpush2.bf16.msra.mxu0 %v1885
        %1957 = vmatprep.mubr.bf16.mxu0 %v1607
        %1958 = vmatmul.mubr.bf16.gmra.mxu0 %v1556
        %v1959 = vpop.f32.mrf.mxu0
        %v1960 = vadd.f32 0.0, %v1959
        %v1961 = vpop.f32.mrf.mxu0
        %v1962 = vpop.f32.mrf.mxu0
        %v1963 = vadd.f32 0.0, %v1962
        %v1964 = vpop.f32.mrf.mxu0
        %1965 = vmatprep.mubr.bf16.mxu0 %v1619
        %1966 = vmatmul.mubr.bf16.gmra.mxu0 %v1557
        %v1967 = vpop.f32.mrf.mxu0
        %v1968 = vadd.f32 0.0, %v1967
        %v1969 = vpop.f32.mrf.mxu0
        %v1970 = vpop.f32.mrf.mxu0
        %v1971 = vadd.f32 0.0, %v1970
        %v1972 = vpop.f32.mrf.mxu0
        %1973 = vmatprep.mubr.bf16.mxu0 %v1631
        %1974 = vmatmul.mubr.bf16.gmra.mxu0 %v1558
        %v1975 = vpop.f32.mrf.mxu0
        %v1976 = vadd.f32 0.0, %v1975
        %v1977 = vpop.f32.mrf.mxu0
        %v1978 = vpop.f32.mrf.mxu0
        %v1979 = vadd.f32 0.0, %v1978
        %v1980 = vpop.f32.mrf.mxu0
        %1981 = vmatprep.mubr.bf16.mxu0 %v1643
        %1982 = vmatmul.mubr.bf16.gmra.mxu0 %v1559
        %v1983 = vpop.f32.mrf.mxu0
        %v1984 = vadd.f32 0.0, %v1983
        %v1985 = vpop.f32.mrf.mxu0
        %v1986 = vpop.f32.mrf.mxu0
        %v1987 = vadd.f32 0.0, %v1986
        %v1988 = vpop.f32.mrf.mxu0
        %1989 = vmatprep.mubr.bf16.mxu0 %v1655
        %1990 = vmatmul.mubr.bf16.gmra.mxu0 %v1560
        %v1991 = vpop.f32.mrf.mxu0
        %v1992 = vadd.f32 0.0, %v1991
        %v1993 = vpop.f32.mrf.mxu0
        %v1994 = vpop.f32.mrf.mxu0
        %v1995 = vadd.f32 0.0, %v1994
        %v1996 = vpop.f32.mrf.mxu0
        %1997 = vmatprep.mubr.bf16.mxu0 %v1667
        %1998 = vmatmul.mubr.bf16.gmra.mxu0 %v1561
        %v1999 = vpop.f32.mrf.mxu0
        %v2000 = vadd.f32 0.0, %v1999
        %v2001 = vpop.f32.mrf.mxu0
        %v2002 = vpop.f32.mrf.mxu0
        %v2003 = vadd.f32 0.0, %v2002
        %v2004 = vpop.f32.mrf.mxu0
        %2005 = vmatprep.mubr.bf16.mxu0 %v1679
        %2006 = vmatmul.mubr.bf16.gmra.mxu0 %v1562
        %v2007 = vpop.f32.mrf.mxu0
        %v2008 = vadd.f32 0.0, %v2007
        %v2009 = vpop.f32.mrf.mxu0
        %v2010 = vpop.f32.mrf.mxu0
        %v2011 = vadd.f32 0.0, %v2010
        %v2012 = vpop.f32.mrf.mxu0
        %2013 = vmatprep.mubr.bf16.mxu0 %v1691
        %2014 = vmatmul.mubr.bf16.gmra.mxu0 %v1563
        %v2015 = vpop.f32.mrf.mxu0
        %v2016 = vadd.f32 0.0, %v2015
        %v2017 = vpop.f32.mrf.mxu0
        %v2018 = vpop.f32.mrf.mxu0
        %v2019 = vadd.f32 0.0, %v2018
        %v2020 = vpop.f32.mrf.mxu0
        %2021 = vdwg.mxu0
        %2022 = vmatprep.subr.bf16.mxu0 0
        %2023 = vmatpush1.bf16.msra.mxu0 %v1900
        %2024 = vmatprep.subr.bf16.mxu0 0
        %2025 = vmatpush1.bf16.msra.mxu0 %v1899
        %2026 = vmatprep.subr.bf16.mxu0 0
        %2027 = vmatpush1.bf16.msra.mxu0 %v1898
        %2028 = vmatprep.subr.bf16.mxu0 0
        %2029 = vmatpush1.bf16.msra.mxu0 %v1897
        %2030 = vmatprep.subr.bf16.mxu0 0
        %2031 = vmatpush1.bf16.msra.mxu0 %v1896
        %2032 = vmatprep.subr.bf16.mxu0 0
        %2033 = vmatpush1.bf16.msra.mxu0 %v1895
        %2034 = vmatprep.subr.bf16.mxu0 0
        %2035 = vmatpush1.bf16.msra.mxu0 %v1894
        %2036 = vmatprep.subr.bf16.mxu0 0
        %2037 = vmatpush1.bf16.msra.mxu0 %v1893
        %2038 = vmatprep.subr.bf16.mxu0 0
        %2039 = vmatpush2.bf16.msra.mxu0 0
        %2040 = vmatprep.subr.bf16.mxu0 0
        %2041 = vmatpush2.bf16.msra.mxu0 0
        %2042 = vmatprep.subr.bf16.mxu0 0
        %2043 = vmatpush2.bf16.msra.mxu0 0
        %2044 = vmatprep.subr.bf16.mxu0 0
        %2045 = vmatpush2.bf16.msra.mxu0 0
        %2046 = vmatprep.subr.bf16.mxu0 0
        %2047 = vmatpush2.bf16.msra.mxu0 0
        %2048 = vmatprep.subr.bf16.mxu0 0
        %2049 = vmatpush2.bf16.msra.mxu0 0
        %2050 = vmatprep.subr.bf16.mxu0 0
        %2051 = vmatpush2.bf16.msra.mxu0 0
        %2052 = vmatprep.subr.bf16.mxu0 0
        %2053 = vmatpush2.bf16.msra.mxu0 0
        %2054 = vmatprep.mubr.bf16.mxu0 0
        %2055 = vmatmul.mubr.bf16.gmra.mxu0 %v1702
        %v2056 = vpop.f32.mrf.mxu0
        %v2057 = vadd.f32 %v1960, %v2056
        %v2058 = vpop.f32.mrf.mxu0
        %v2059 = vpop.f32.mrf.mxu0
        %v2060 = vadd.f32 %v1963, %v2059
        %v2061 = vpop.f32.mrf.mxu0
        %2062 = vmatprep.mubr.bf16.mxu0 0
        %2063 = vmatmul.mubr.bf16.gmra.mxu0 %v1705
        %v2064 = vpop.f32.mrf.mxu0
        %v2065 = vadd.f32 %v1968, %v2064
        %v2066 = vpop.f32.mrf.mxu0
        %v2067 = vpop.f32.mrf.mxu0
        %v2068 = vadd.f32 %v1971, %v2067
        %v2069 = vpop.f32.mrf.mxu0
        %2070 = vmatprep.mubr.bf16.mxu0 0
        %2071 = vmatmul.mubr.bf16.gmra.mxu0 %v1708
        %v2072 = vpop.f32.mrf.mxu0
        %v2073 = vadd.f32 %v1976, %v2072
        %v2074 = vpop.f32.mrf.mxu0
        %v2075 = vpop.f32.mrf.mxu0
        %v2076 = vadd.f32 %v1979, %v2075
        %v2077 = vpop.f32.mrf.mxu0
        %2078 = vmatprep.mubr.bf16.mxu0 0
        %2079 = vmatmul.mubr.bf16.gmra.mxu0 %v1711
        %v2080 = vpop.f32.mrf.mxu0
        %v2081 = vadd.f32 %v1984, %v2080
        %v2082 = vpop.f32.mrf.mxu0
        %v2083 = vpop.f32.mrf.mxu0
        %v2084 = vadd.f32 %v1987, %v2083
        %v2085 = vpop.f32.mrf.mxu0
        %2086 = vmatprep.mubr.bf16.mxu0 0
        %2087 = vmatmul.mubr.bf16.gmra.mxu0 %v1714
        %v2088 = vpop.f32.mrf.mxu0
        %v2089 = vadd.f32 %v1992, %v2088
        %v2090 = vpop.f32.mrf.mxu0
        %v2091 = vpop.f32.mrf.mxu0
        %v2092 = vadd.f32 %v1995, %v2091
        %v2093 = vpop.f32.mrf.mxu0
        %2094 = vmatprep.mubr.bf16.mxu0 0
        %2095 = vmatmul.mubr.bf16.gmra.mxu0 %v1717
        %v2096 = vpop.f32.mrf.mxu0
        %v2097 = vadd.f32 %v2000, %v2096
        %v2098 = vpop.f32.mrf.mxu0
        %v2099 = vpop.f32.mrf.mxu0
        %v2100 = vadd.f32 %v2003, %v2099
        %v2101 = vpop.f32.mrf.mxu0
        %2102 = vmatprep.mubr.bf16.mxu0 0
        %2103 = vmatmul.mubr.bf16.gmra.mxu0 %v1720
        %v2104 = vpop.f32.mrf.mxu0
        %v2105 = vadd.f32 %v2008, %v2104
        %v2106 = vpop.f32.mrf.mxu0
        %v2107 = vpop.f32.mrf.mxu0
        %v2108 = vadd.f32 %v2011, %v2107
        %v2109 = vpop.f32.mrf.mxu0
        %2110 = vmatprep.mubr.bf16.mxu0 0
        %2111 = vmatmul.mubr.bf16.gmra.mxu0 %v1723
        %v2112 = vpop.f32.mrf.mxu0
        %v2113 = vadd.f32 %v2016, %v2112
        %v2114 = vpop.f32.mrf.mxu0
        %v2115 = vpop.f32.mrf.mxu0
        %v2116 = vadd.f32 %v2019, %v2115
        %v2117 = vpop.f32.mrf.mxu0
        %2118 = vdwg.mxu0
        %v2119 = vld [vmem:[#allocation2] sm:$0xff]
        %v2120 = vld [vmem:[#allocation2 + $0x8] sm:$0xff]
        %v2121 = vld [vmem:[#allocation2 + $0x10] sm:$0xff]
        %v2122 = vld [vmem:[#allocation2 + $0x18] sm:$0xff]
        %v2123 = vld [vmem:[#allocation2 + $0x20] sm:$0xff]
        %v2124 = vld [vmem:[#allocation2 + $0x28] sm:$0xff]
        %v2125 = vld [vmem:[#allocation2 + $0x30] sm:$0xff]
        %v2126 = vld [vmem:[#allocation2 + $0x38] sm:$0xff]
        %v2127 = vld [vmem:[#allocation2 + $0x40] sm:$0xff]
        %v2128 = vld [vmem:[#allocation2 + $0x48] sm:$0xff]
        %v2129 = vld [vmem:[#allocation2 + $0x50] sm:$0xff]
        %v2130 = vld [vmem:[#allocation2 + $0x58] sm:$0xff]
        %v2131 = vld [vmem:[#allocation2 + $0x60] sm:$0xff]
        %v2132 = vld [vmem:[#allocation2 + $0x68] sm:$0xff]
        %v2133 = vld [vmem:[#allocation2 + $0x70] sm:$0xff]
        %v2134 = vld [vmem:[#allocation2 + $0x78] sm:$0xff]
        %v2135 = vadd.f32 %v2119, %v2057
        %v2136 = vadd.f32 %v2120, %v2060
        %v2137 = vadd.f32 %v2121, %v2065
        %v2138 = vadd.f32 %v2122, %v2068
        %v2139 = vadd.f32 %v2123, %v2073
        %v2140 = vadd.f32 %v2124, %v2076
        %v2141 = vadd.f32 %v2125, %v2081
        %v2142 = vadd.f32 %v2126, %v2084
        %v2143 = vadd.f32 %v2127, %v2089
        %v2144 = vadd.f32 %v2128, %v2092
        %v2145 = vadd.f32 %v2129, %v2097
        %v2146 = vadd.f32 %v2130, %v2100
        %v2147 = vadd.f32 %v2131, %v2105
        %v2148 = vadd.f32 %v2132, %v2108
        %v2149 = vadd.f32 %v2133, %v2113
        %v2150 = vadd.f32 %v2134, %v2116
        %2151 = vst [vmem:[#allocation2] sm:$0xff] %v2135
        %2152 = vst [vmem:[#allocation2 + $0x8] sm:$0xff] %v2136
        %2153 = vst [vmem:[#allocation2 + $0x10] sm:$0xff] %v2137
        %2154 = vst [vmem:[#allocation2 + $0x18] sm:$0xff] %v2138
        %2155 = vst [vmem:[#allocation2 + $0x20] sm:$0xff] %v2139
        %2156 = vst [vmem:[#allocation2 + $0x28] sm:$0xff] %v2140
        %2157 = vst [vmem:[#allocation2 + $0x30] sm:$0xff] %v2141
        %2158 = vst [vmem:[#allocation2 + $0x38] sm:$0xff] %v2142
        %2159 = vst [vmem:[#allocation2 + $0x40] sm:$0xff] %v2143
        %2160 = vst [vmem:[#allocation2 + $0x48] sm:$0xff] %v2144
        %2161 = vst [vmem:[#allocation2 + $0x50] sm:$0xff] %v2145
        %2162 = vst [vmem:[#allocation2 + $0x58] sm:$0xff] %v2146
        %2163 = vst [vmem:[#allocation2 + $0x60] sm:$0xff] %v2147
        %2164 = vst [vmem:[#allocation2 + $0x68] sm:$0xff] %v2148
        %2165 = vst [vmem:[#allocation2 + $0x70] sm:$0xff] %v2149
        %2166 = vst [vmem:[#allocation2 + $0x78] sm:$0xff] %v2150
        %v2167 = vld [vmem:[#allocation2] sm:$0xff]
        %v2168 = vld [vmem:[#allocation2 + $0x8] sm:$0xff]
        %v2169 = vld [vmem:[#allocation2 + $0x10] sm:$0xff]
        %v2170 = vld [vmem:[#allocation2 + $0x18] sm:$0xff]
        %v2171 = vld [vmem:[#allocation2 + $0x20] sm:$0xff]
        %v2172 = vld [vmem:[#allocation2 + $0x28] sm:$0xff]
        %v2173 = vld [vmem:[#allocation2 + $0x30] sm:$0xff]
        %v2174 = vld [vmem:[#allocation2 + $0x38] sm:$0xff]
        %v2175 = vld [vmem:[#allocation2 + $0x40] sm:$0xff]
        %v2176 = vld [vmem:[#allocation2 + $0x48] sm:$0xff]
        %v2177 = vld [vmem:[#allocation2 + $0x50] sm:$0xff]
        %v2178 = vld [vmem:[#allocation2 + $0x58] sm:$0xff]
        %v2179 = vld [vmem:[#allocation2 + $0x60] sm:$0xff]
        %v2180 = vld [vmem:[#allocation2 + $0x68] sm:$0xff]
        %v2181 = vld [vmem:[#allocation2 + $0x70] sm:$0xff]
        %v2182 = vld [vmem:[#allocation2 + $0x78] sm:$0xff]
        %v2183 = vld [vmem:[%s2] sm:$0x1]
        %v2185 = vlaneseq
        %v2186 = vshrl.u32 %v2185, 7
        %v2187 = vsub.s32 0, %v2186
        %v2188 = vrot.slane %v2183, %v2187
        %v2190 = vadd.f32 %v2167, %v2188
        %v2191 = vadd.f32 %v2168, %v2188
        %v2192 = vadd.f32 %v2169, %v2188
        %v2193 = vadd.f32 %v2170, %v2188
        %v2194 = vadd.f32 %v2171, %v2188
        %v2195 = vadd.f32 %v2172, %v2188
        %v2196 = vadd.f32 %v2173, %v2188
        %v2197 = vadd.f32 %v2174, %v2188
        %v2198 = vadd.f32 %v2175, %v2188
        %v2199 = vadd.f32 %v2176, %v2188
        %v2200 = vadd.f32 %v2177, %v2188
        %v2201 = vadd.f32 %v2178, %v2188
        %v2202 = vadd.f32 %v2179, %v2188
        %v2203 = vadd.f32 %v2180, %v2188
        %v2204 = vadd.f32 %v2181, %v2188
        %v2205 = vadd.f32 %v2182, %v2188
        %v2206 = vmax.f32 %v2190, 0.0
        %v2207 = vmax.f32 %v2191, 0.0
        %v2208 = vmax.f32 %v2192, 0.0
        %v2209 = vmax.f32 %v2193, 0.0
        %v2210 = vmax.f32 %v2194, 0.0
        %v2211 = vmax.f32 %v2195, 0.0
        %v2212 = vmax.f32 %v2196, 0.0
        %v2213 = vmax.f32 %v2197, 0.0
        %v2214 = vmax.f32 %v2198, 0.0
        %v2215 = vmax.f32 %v2199, 0.0
        %v2216 = vmax.f32 %v2200, 0.0
        %v2217 = vmax.f32 %v2201, 0.0
        %v2218 = vmax.f32 %v2202, 0.0
        %v2219 = vmax.f32 %v2203, 0.0
        %v2220 = vmax.f32 %v2204, 0.0
        %v2221 = vmax.f32 %v2205, 0.0
        %2222 = vst [vmem:[%s177] sm:$0xff] %v2206
        %2223 = vst [vmem:[%s177 + $0x8] sm:$0xff] %v2207
        %2224 = vst [vmem:[%s177 + $0x10] sm:$0xff] %v2208
        %2225 = vst [vmem:[%s177 + $0x18] sm:$0xff] %v2209
        %2226 = vst [vmem:[%s177 + $0x20] sm:$0xff] %v2210
        %2227 = vst [vmem:[%s177 + $0x28] sm:$0xff] %v2211
        %2228 = vst [vmem:[%s177 + $0x30] sm:$0xff] %v2212
        %2229 = vst [vmem:[%s177 + $0x38] sm:$0xff] %v2213
        %2230 = vst [vmem:[%s177 + $0x40] sm:$0xff] %v2214
        %2231 = vst [vmem:[%s177 + $0x48] sm:$0xff] %v2215
        %2232 = vst [vmem:[%s177 + $0x50] sm:$0xff] %v2216
        %2233 = vst [vmem:[%s177 + $0x58] sm:$0xff] %v2217
        %2234 = vst [vmem:[%s177 + $0x60] sm:$0xff] %v2218
        %2235 = vst [vmem:[%s177 + $0x68] sm:$0xff] %v2219
        %2236 = vst [vmem:[%s177 + $0x70] sm:$0xff] %v2220
        %2237 = vst [vmem:[%s177 + $0x78] sm:$0xff] %v2221
        %s2238 = sand.u32 %s107, 1
        %s2239 = scalar_lea.sflag [#allocation4], %s2238
        %s2240 = sand.u32 %s107, 1
        %s2241 = smul.addr %s2240, 128
        %s2242 = scalar_lea.vmem [#allocation3], %s2241
        // Predicated region
        $region33: #{tpu_custom_call.1} parent=31 // pred_check
          %p2243 = pneg %p117
        $region34: #{tpu_custom_call.1} parent=31 // pred_check_branch
          %2245 = sbr.rel (%p2243) target = $region36
        $region35: #{tpu_custom_call.1} parent=31 // pred_region
          %s2246 = smul.u32 8, %s22
          %s2248 = ssub.s32 2048, 2048
          %2249 = vsyncadd %s2239, %s2248
          %s2250 = smul.addr %s2246, 2
          %s2251 = smul.addr %s21, 32
          %s2252 = sadd.s32 %s2250, %s2251
          %s2253 = smul.addr %s2252, 128
          %s2254 = scalar_lea.hbm %s3, %s2253
          %s2255 = sshll.u32 %s2242, 4
          %s2256 = int_to_ptr.vmem [resolvable:$true] %s2255
          %2261 = dma.vmem_to_hbm [thread:$0]  %s2256, 2048, %s2254, %s2239, 128, 128, 8
        $region36: #{tpu_custom_call.1} parent=31 // pred_fallthru
          _
      $region32: #{tpu_custom_call.1} parent=5 // pred_fallthru
        _
      %p2262 = scmp.le.s32.totalorder 2, %s12
      // Predicated region
      $region37: #{tpu_custom_call.1} parent=5 // pred_check
        %p2263 = pneg %p2262
      $region38: #{tpu_custom_call.1} parent=5 // pred_check_branch
        %2265 = sbr.rel (%p2263) target = $region40
      $region39: #{tpu_custom_call.1} parent=5 // pred_region
        %s2266 = ssub.s32 %s12, 2
        // Predicated region
        $region41: #{tpu_custom_call.1} parent=39 // pred_check
          %p2267 = pneg %p123
        $region42: #{tpu_custom_call.1} parent=39 // pred_check_branch
          %2269 = sbr.rel (%p2267) target = $region44
        $region43: #{tpu_custom_call.1} parent=39 // pred_region
          %s2270 = sand.u32 %s108, 1
          %s2271 = scalar_lea.sflag [#allocation4], %s2270
          %s2272 = sand.u32 %s108, 1
          %s2273 = smul.addr %s2272, 128
          %s2274 = scalar_lea.vmem [#allocation3], %s2273
          %2275 = dma.done %s2271, 2048
        $region44: #{tpu_custom_call.1} parent=39 // pred_fallthru
          _
      $region40: #{tpu_custom_call.1} parent=5 // pred_fallthru
        _
    $region6: #{tpu_custom_call.1} parent=1 // loop_footer
      %s16 = sadd.s32 1, %s12
    $region7: #{tpu_custom_call.1} parent=1 // loop_footer_branch
      %11 = sbr.rel target = $region3
    $region8: #{tpu_custom_call.1} parent=1 // loop_exit
      _
    %2276 = vsyncpa [#allocation4], 1
    %s2277 = scalar_lea.sflag [#allocation4], 1
    %2278 = vsyncpa %s2277, 1

</llo_original>
